<compile_context>
chip_gen: v5e
topology: v5e:2x2
jax: 0.10.0
libtpu: 0.0.40
codegen_flags: <defaults>
</compile_context>

<pallas_src>
import jax
import jax.numpy as jnp
from jax import lax
from jax.experimental import pallas as pl
from jax.experimental.pallas import tpu as pltpu


# ---------------------------------------------------------------------------
# Pallas kernel: both Q-heads, 2-layer LSTM recurrence + Linear(H, 1) heads
# ---------------------------------------------------------------------------
def _fused_lstm_q_kernel(x_ref, wx0_ref, b0_ref, wr0_ref, w1_ref, b1_ref,
                         wlin_ref, blin_ref, out1_ref, out2_ref):
    # x_ref:    (S, C)        shared input sequence
    # wx0_ref:  (C, 8H)       layer-0 input->gates for both heads (cols: i1 i2 f1 f2 o1 o2 g1 g2)
    # b0_ref:   (1, 8H)       layer-0 combined bias (b_ih + b_hh), both heads
    # wr0_ref:  (2H, 8H)      layer-0 hidden->gates, block-diagonal over heads
    # w1_ref:   (4H, 8H)      layer-1 fused input+recurrent weights, block-diagonal over heads
    # b1_ref:   (1, 8H)       layer-1 combined bias, both heads
    # wlin_ref: (2H, 2)       Linear heads stacked block-diagonally; blin_ref: (1, 2)
    # out1/out2:(S, 1)        per-head Q values
    S = x_ref.shape[0]
    P = wr0_ref.shape[0]          # 2H  : packed hidden width  [head1 | head2]
    SIG = 3 * P                   # 6H  : sigmoid slab (i, f, o for both heads)

    wr0 = wr0_ref[...]
    w1 = w1_ref[...]
    b1 = b1_ref[...]

    # Hoisted layer-0 input projection for all timesteps & both heads:
    # (S, C) @ (C, 8H) + bias — one well-shaped MXU op outside the recurrence.
    xg = jnp.dot(x_ref[...], wx0_ref[...],
                 preferred_element_type=jnp.float32) + b0_ref[...]

    def cell(pre, c_prev):
        # pre lane layout: [i1 i2 | f1 f2 | o1 o2 | g1 g2], each block H wide.
        sig = jax.nn.sigmoid(pre[:, :SIG])      # one EUP slab for i, f, o
        g = jnp.tanh(pre[:, SIG:])              # one EUP slab for g
        i = sig[:, :P]
        f = sig[:, P:2 * P]
        o = sig[:, 2 * P:]
        c_new = f * c_prev + i * g              # packed [head1 | head2]
        h_new = o * jnp.tanh(c_new)
        return h_new, c_new

    zero = jnp.zeros((1, P), jnp.float32)
    h0, c0, h1, c1 = zero, zero, zero, zero     # packed states for both heads
    h1_seq = []
    for t in range(S):                          # S static & small -> fully unrolled
        # Layer 0: recurrent dot only (input part precomputed in xg).
        pre0 = xg[t:t + 1, :] + jnp.dot(h0, wr0,
                                        preferred_element_type=jnp.float32)
        h0, c0 = cell(pre0, c0)
        # Layer 1: fused input + recurrent dot over [h_l0 | h_l1_prev].
        lhs1 = jnp.concatenate([h0, h1], axis=1)                     # (1, 4H)
        pre1 = jnp.dot(lhs1, w1, preferred_element_type=jnp.float32) + b1
        h1, c1 = cell(pre1, c1)
        h1_seq.append(h1)

    # Hoisted Linear heads: one (S, 2H) @ (2H, 2) dot + bias, single store per output.
    h1_all = jnp.concatenate(h1_seq, axis=0)                         # (S, 2H)
    out = jnp.dot(h1_all, wlin_ref[...],
                  preferred_element_type=jnp.float32) + blin_ref[...]  # (S, 2)
    out1_ref[...] = out[:, 0:1]
    out2_ref[...] = out[:, 1:2]


# ---------------------------------------------------------------------------
# Wrapper: both heads in ONE pallas_call, everything VMEM-resident, no grid.
# ---------------------------------------------------------------------------
def lstm_q_network_forward(observations, actions, fused):
    """Mirrors LSTMQNetwork.forward for both heads with one kernel launch."""
    x = jnp.concatenate([observations, actions], axis=1)     # cat dim=1
    S = x.shape[0]
    vmem = pl.BlockSpec(memory_space=pltpu.MemorySpace.VMEM)
    return pl.pallas_call(
        _fused_lstm_q_kernel,
        out_shape=(jax.ShapeDtypeStruct((S, 1), jnp.float32),
                   jax.ShapeDtypeStruct((S, 1), jnp.float32)),
        in_specs=[vmem] * 8,
        out_specs=(vmem, vmem),
    )(x, fused["wx0"], fused["b0"], fused["wr0"], fused["w1"], fused["b1"],
      fused["wlin"], fused["blin"])


# ---------------------------------------------------------------------------
# Per-head PyTorch-layout parameters (uniform(-1/sqrt(H), 1/sqrt(H)))
# ---------------------------------------------------------------------------
def init_head_params(key, c_in, hidden):
    bound = 1.0 / float(hidden) ** 0.5
    ks = jax.random.split(key, 10)

    def u(k, shape):
        return jax.random.uniform(k, shape, jnp.float32, -bound, bound)

    return {
        "w_ih0": u(ks[0], (4 * hidden, c_in)),     # gate order i, f, g, o (PyTorch)
        "w_hh0": u(ks[1], (4 * hidden, hidden)),
        "b_ih0": u(ks[2], (4 * hidden,)),
        "b_hh0": u(ks[3], (4 * hidden,)),
        "w_ih1": u(ks[4], (4 * hidden, hidden)),
        "w_hh1": u(ks[5], (4 * hidden, hidden)),
        "b_ih1": u(ks[6], (4 * hidden,)),
        "b_hh1": u(ks[7], (4 * hidden,)),
        "w_lin": u(ks[8], (1, hidden)),
        "b_lin": u(ks[9], (1,)),
    }


# ---------------------------------------------------------------------------
# Build fused kernel weights from the two heads' PyTorch-layout parameters.
# Fused gate-column layout (8H lanes): [i1 i2 | f1 f2 | o1 o2 | g1 g2].
# ---------------------------------------------------------------------------
def _gate_blocks(w, H):
    # w: (4H, K) in PyTorch gate order i, f, g, o  ->  dict of (K, H) blocks.
    return {"i": w[0:H].T, "f": w[H:2 * H].T, "g": w[2 * H:3 * H].T, "o": w[3 * H:4 * H].T}


def _fused_cols(b1, b2):
    return jnp.concatenate([b1["i"], b2["i"], b1["f"], b2["f"],
                            b1["o"], b2["o"], b1["g"], b2["g"]], axis=1)


def _fused_cols_one_head(b, head):
    z = jnp.zeros_like(b["i"])
    if head == 0:
        return jnp.concatenate([b["i"], z, b["f"], z, b["o"], z, b["g"], z], axis=1)
    return jnp.concatenate([z, b["i"], z, b["f"], z, b["o"], z, b["g"]], axis=1)


def build_fused_params(p1, p2, H):
    # Layer-0 input projection (shared x): (C, 8H), plus combined bias (1, 8H).
    wx0 = _fused_cols(_gate_blocks(p1["w_ih0"], H), _gate_blocks(p2["w_ih0"], H))
    b0 = _fused_cols(_gate_blocks((p1["b_ih0"] + p1["b_hh0"]).reshape(-1, 1), H),
                     _gate_blocks((p2["b_ih0"] + p2["b_hh0"]).reshape(-1, 1), H))
    # Layer-0 recurrent weights, block-diagonal over heads: (2H, 8H).
    wr0 = jnp.concatenate(
        [_fused_cols_one_head(_gate_blocks(p1["w_hh0"], H), 0),
         _fused_cols_one_head(_gate_blocks(p2["w_hh0"], H), 1)], axis=0)
    # Layer-1 fused input+recurrent weights: rows = [h_l0_h1 | h_l0_h2 | h_l1_h1 | h_l1_h2].
    w1 = jnp.concatenate(
        [_fused_cols_one_head(_gate_blocks(p1["w_ih1"], H), 0),
         _fused_cols_one_head(_gate_blocks(p2["w_ih1"], H), 1),
         _fused_cols_one_head(_gate_blocks(p1["w_hh1"], H), 0),
         _fused_cols_one_head(_gate_blocks(p2["w_hh1"], H), 1)], axis=0)
    b1 = _fused_cols(_gate_blocks((p1["b_ih1"] + p1["b_hh1"]).reshape(-1, 1), H),
                     _gate_blocks((p2["b_ih1"] + p2["b_hh1"]).reshape(-1, 1), H))
    # Linear heads stacked block-diagonally: (2H, 2) weight, (1, 2) bias.
    zH1 = jnp.zeros((H, 1), jnp.float32)
    wlin = jnp.concatenate(
        [jnp.concatenate([p1["w_lin"].T, zH1], axis=1),
         jnp.concatenate([zH1, p2["w_lin"].T], axis=1)], axis=0)
    blin = jnp.concatenate([p1["b_lin"], p2["b_lin"]]).reshape(1, 2)
    return {"wx0": wx0, "b0": b0, "wr0": wr0, "w1": w1, "b1": b1,
            "wlin": wlin, "blin": blin}


# ---------------------------------------------------------------------------
# Pure-JAX reference (per head, canonical PyTorch math) for correctness check.
# ---------------------------------------------------------------------------
def ref_lstm_q_head(x, p, H):
    def cell(x_t, h, c, w_ih, w_hh, b_ih, b_hh):
        gates = x_t @ w_ih.T + h @ w_hh.T + b_ih + b_hh
        i = jax.nn.sigmoid(gates[:, 0:H])
        f = jax.nn.sigmoid(gates[:, H:2 * H])
        g = jnp.tanh(gates[:, 2 * H:3 * H])
        o = jax.nn.sigmoid(gates[:, 3 * H:4 * H])
        c = f * c + i * g
        h = o * jnp.tanh(c)
        return h, c

    def step(carry, x_t):
        h1, c1, h2, c2 = carry
        x_t = x_t[None, :]
        h1, c1 = cell(x_t, h1, c1, p["w_ih0"], p["w_hh0"], p["b_ih0"], p["b_hh0"])
        h2, c2 = cell(h1, h2, c2, p["w_ih1"], p["w_hh1"], p["b_ih1"], p["b_hh1"])
        y = h2 @ p["w_lin"].T + p["b_lin"]
        return (h1, c1, h2, c2), y[0]

    z = jnp.zeros((1, H), jnp.float32)
    _, ys = lax.scan(step, (z, z, z, z), x)
    return ys


# ---------------------------------------------------------------------------
if __name__ == "__main__":
    n_observations = 10
    n_actions = 6
    hidden_size = 32      # 8H = 256 -> one MXU-wide gate dot per layer per step
    B = 8                 # forward() treats this as the (unbatched) sequence length

    key = jax.random.PRNGKey(0)
    k_p1, k_p2, k_obs, k_act = jax.random.split(key, 4)

    p1 = init_head_params(k_p1, n_observations + n_actions, hidden_size)
    p2 = init_head_params(k_p2, n_observations + n_actions, hidden_size)
    fused = build_fused_params(p1, p2, hidden_size)

    observations = jax.random.normal(k_obs, (B, n_observations), jnp.float32)
    actions = jax.random.normal(k_act, (B, n_actions), jnp.float32)

    x1, x2 = lstm_q_network_forward(observations, actions, fused)
    x1 = jax.block_until_ready(x1)
    x2 = jax.block_until_ready(x2)

    # Correctness check vs. pure-JAX per-head reference.
    x_cat = jnp.concatenate([observations, actions], axis=1)
    r1 = ref_lstm_q_head(x_cat, p1, hidden_size)
    r2 = ref_lstm_q_head(x_cat, p2, hidden_size)
    assert x1.shape == (B, 1) and x2.shape == (B, 1)
    assert jnp.allclose(x1, r1, atol=1e-4, rtol=1e-4), "network_1 mismatch"
    assert jnp.allclose(x2, r2, atol=1e-4, rtol=1e-4), "network_2 mismatch"

    # TODO(synk): next_step()/reset() stateful single-step API not implemented (only
    # forward() was required); it would reuse the same fused cell math with carried (h0, c0).
    print("KERNEL_OK")
</pallas_src>

<mosaic_0001>
module attributes {stable_mosaic.version = 11 : i64} {
  func.func @_fused_lstm_q_kernel(%arg0: memref<8x16xf32, #tpu.memory_space<vmem>>, %arg1: memref<16x256xf32, #tpu.memory_space<vmem>>, %arg2: memref<1x256xf32, #tpu.memory_space<vmem>>, %arg3: memref<64x256xf32, #tpu.memory_space<vmem>>, %arg4: memref<128x256xf32, #tpu.memory_space<vmem>>, %arg5: memref<1x256xf32, #tpu.memory_space<vmem>>, %arg6: memref<64x2xf32, #tpu.memory_space<vmem>>, %arg7: memref<1x2xf32, #tpu.memory_space<vmem>>, %arg8: memref<8x1xf32, #tpu.memory_space<vmem>>, %arg9: memref<8x1xf32, #tpu.memory_space<vmem>>) attributes {dimension_semantics = [], scalar_prefetch = 0 : i64, scratch_operands = 0 : i64, tpu.core_type = #tpu.core_type<tc>} {
    %c0 = arith.constant 0 : index
    %c0_0 = arith.constant 0 : index
    %0 = vector.load %arg3[%c0, %c0_0] : memref<64x256xf32, #tpu.memory_space<vmem>>, vector<64x256xf32>
    %c0_1 = arith.constant 0 : index
    %c0_2 = arith.constant 0 : index
    %1 = vector.load %arg4[%c0_1, %c0_2] : memref<128x256xf32, #tpu.memory_space<vmem>>, vector<128x256xf32>
    %c0_3 = arith.constant 0 : index
    %c0_4 = arith.constant 0 : index
    %2 = vector.load %arg5[%c0_3, %c0_4] : memref<1x256xf32, #tpu.memory_space<vmem>>, vector<1x256xf32>
    %c0_5 = arith.constant 0 : index
    %c0_6 = arith.constant 0 : index
    %3 = vector.load %arg0[%c0_5, %c0_6] : memref<8x16xf32, #tpu.memory_space<vmem>>, vector<8x16xf32>
    %c0_7 = arith.constant 0 : index
    %c0_8 = arith.constant 0 : index
    %4 = vector.load %arg1[%c0_7, %c0_8] : memref<16x256xf32, #tpu.memory_space<vmem>>, vector<16x256xf32>
    %cst = arith.constant dense<0.000000e+00> : vector<8x256xf32>
    %5 = tpu.matmul %3, %4, %cst {dimension_numbers = #tpu.dot_dimension_numbers<[1], [0], [0], [1], [0, 0, 1, 1], [], []>} : vector<8x16xf32>, vector<16x256xf32>, vector<8x256xf32> -> vector<8x256xf32>
    %c0_9 = arith.constant 0 : index
    %c0_10 = arith.constant 0 : index
    %6 = vector.load %arg2[%c0_9, %c0_10] : memref<1x256xf32, #tpu.memory_space<vmem>>, vector<1x256xf32>
    %7 = vector.broadcast %6 : vector<1x256xf32> to vector<8x256xf32>
    %8 = arith.addf %5, %7 : vector<8x256xf32>
    %cst_11 = arith.constant 0.000000e+00 : f32
    %9 = vector.broadcast %cst_11 : f32 to vector<1x64xf32>
    %10 = vector.extract_strided_slice %8 {offsets = [0, 0], sizes = [1, 256], strides = [1, 1]} : vector<8x256xf32> to vector<1x256xf32>
    %cst_12 = arith.constant dense<0.000000e+00> : vector<1x256xf32>
    %11 = tpu.matmul %9, %0, %cst_12 {dimension_numbers = #tpu.dot_dimension_numbers<[1], [0], [0], [1], [0, 0, 1, 1], [], []>} : vector<1x64xf32>, vector<64x256xf32>, vector<1x256xf32> -> vector<1x256xf32>
    %12 = arith.addf %10, %11 : vector<1x256xf32>
    %13 = vector.extract_strided_slice %12 {offsets = [0, 0], sizes = [1, 192], strides = [1, 1]} : vector<1x256xf32> to vector<1x192xf32>
    %14 = arith.negf %13 : vector<1x192xf32>
    %15 = math.exp %14 : vector<1x192xf32>
    %cst_13 = arith.constant 1.000000e+00 : f32
    %16 = vector.broadcast %cst_13 : f32 to vector<1x192xf32>
    %17 = arith.addf %16, %15 : vector<1x192xf32>
    %18 = arith.divf %16, %17 : vector<1x192xf32>
    %19 = vector.extract_strided_slice %12 {offsets = [0, 192], sizes = [1, 64], strides = [1, 1]} : vector<1x256xf32> to vector<1x64xf32>
    %20 = math.tanh %19 : vector<1x64xf32>
    %21 = vector.extract_strided_slice %18 {offsets = [0, 0], sizes = [1, 64], strides = [1, 1]} : vector<1x192xf32> to vector<1x64xf32>
    %22 = vector.extract_strided_slice %18 {offsets = [0, 64], sizes = [1, 64], strides = [1, 1]} : vector<1x192xf32> to vector<1x64xf32>
    %23 = vector.extract_strided_slice %18 {offsets = [0, 128], sizes = [1, 64], strides = [1, 1]} : vector<1x192xf32> to vector<1x64xf32>
    %24 = arith.mulf %22, %9 : vector<1x64xf32>
    %25 = arith.mulf %21, %20 : vector<1x64xf32>
    %26 = arith.addf %24, %25 : vector<1x64xf32>
    %27 = math.tanh %26 : vector<1x64xf32>
    %28 = arith.mulf %23, %27 : vector<1x64xf32>
    %29 = tpu.concatenate %28, %9 in 1 : vector<1x64xf32>, vector<1x64xf32> -> vector<1x128xf32>
    %cst_14 = arith.constant dense<0.000000e+00> : vector<1x256xf32>
    %30 = tpu.matmul %29, %1, %cst_14 {dimension_numbers = #tpu.dot_dimension_numbers<[1], [0], [0], [1], [0, 0, 1, 1], [], []>} : vector<1x128xf32>, vector<128x256xf32>, vector<1x256xf32> -> vector<1x256xf32>
    %31 = arith.addf %30, %2 : vector<1x256xf32>
    %32 = vector.extract_strided_slice %31 {offsets = [0, 0], sizes = [1, 192], strides = [1, 1]} : vector<1x256xf32> to vector<1x192xf32>
    %33 = arith.negf %32 : vector<1x192xf32>
    %34 = math.exp %33 : vector<1x192xf32>
    %cst_15 = arith.constant 1.000000e+00 : f32
    %35 = vector.broadcast %cst_15 : f32 to vector<1x192xf32>
    %36 = arith.addf %35, %34 : vector<1x192xf32>
    %37 = arith.divf %35, %36 : vector<1x192xf32>
    %38 = vector.extract_strided_slice %31 {offsets = [0, 192], sizes = [1, 64], strides = [1, 1]} : vector<1x256xf32> to vector<1x64xf32>
    %39 = math.tanh %38 : vector<1x64xf32>
    %40 = vector.extract_strided_slice %37 {offsets = [0, 0], sizes = [1, 64], strides = [1, 1]} : vector<1x192xf32> to vector<1x64xf32>
    %41 = vector.extract_strided_slice %37 {offsets = [0, 64], sizes = [1, 64], strides = [1, 1]} : vector<1x192xf32> to vector<1x64xf32>
    %42 = vector.extract_strided_slice %37 {offsets = [0, 128], sizes = [1, 64], strides = [1, 1]} : vector<1x192xf32> to vector<1x64xf32>
    %43 = arith.mulf %41, %9 : vector<1x64xf32>
    %44 = arith.mulf %40, %39 : vector<1x64xf32>
    %45 = arith.addf %43, %44 : vector<1x64xf32>
    %46 = math.tanh %45 : vector<1x64xf32>
    %47 = arith.mulf %42, %46 : vector<1x64xf32>
    %48 = vector.extract_strided_slice %8 {offsets = [1, 0], sizes = [1, 256], strides = [1, 1]} : vector<8x256xf32> to vector<1x256xf32>
    %cst_16 = arith.constant dense<0.000000e+00> : vector<1x256xf32>
    %49 = tpu.matmul %28, %0, %cst_16 {dimension_numbers = #tpu.dot_dimension_numbers<[1], [0], [0], [1], [0, 0, 1, 1], [], []>} : vector<1x64xf32>, vector<64x256xf32>, vector<1x256xf32> -> vector<1x256xf32>
    %50 = arith.addf %48, %49 : vector<1x256xf32>
    %51 = vector.extract_strided_slice %50 {offsets = [0, 0], sizes = [1, 192], strides = [1, 1]} : vector<1x256xf32> to vector<1x192xf32>
    %52 = arith.negf %51 : vector<1x192xf32>
    %53 = math.exp %52 : vector<1x192xf32>
    %cst_17 = arith.constant 1.000000e+00 : f32
    %54 = vector.broadcast %cst_17 : f32 to vector<1x192xf32>
    %55 = arith.addf %54, %53 : vector<1x192xf32>
    %56 = arith.divf %54, %55 : vector<1x192xf32>
    %57 = vector.extract_strided_slice %50 {offsets = [0, 192], sizes = [1, 64], strides = [1, 1]} : vector<1x256xf32> to vector<1x64xf32>
    %58 = math.tanh %57 : vector<1x64xf32>
    %59 = vector.extract_strided_slice %56 {offsets = [0, 0], sizes = [1, 64], strides = [1, 1]} : vector<1x192xf32> to vector<1x64xf32>
    %60 = vector.extract_strided_slice %56 {offsets = [0, 64], sizes = [1, 64], strides = [1, 1]} : vector<1x192xf32> to vector<1x64xf32>
    %61 = vector.extract_strided_slice %56 {offsets = [0, 128], sizes = [1, 64], strides = [1, 1]} : vector<1x192xf32> to vector<1x64xf32>
    %62 = arith.mulf %60, %26 : vector<1x64xf32>
    %63 = arith.mulf %59, %58 : vector<1x64xf32>
    %64 = arith.addf %62, %63 : vector<1x64xf32>
    %65 = math.tanh %64 : vector<1x64xf32>
    %66 = arith.mulf %61, %65 : vector<1x64xf32>
    %67 = tpu.concatenate %66, %47 in 1 : vector<1x64xf32>, vector<1x64xf32> -> vector<1x128xf32>
    %cst_18 = arith.constant dense<0.000000e+00> : vector<1x256xf32>
    %68 = tpu.matmul %67, %1, %cst_18 {dimension_numbers = #tpu.dot_dimension_numbers<[1], [0], [0], [1], [0, 0, 1, 1], [], []>} : vector<1x128xf32>, vector<128x256xf32>, vector<1x256xf32> -> vector<1x256xf32>
    %69 = arith.addf %68, %2 : vector<1x256xf32>
    %70 = vector.extract_strided_slice %69 {offsets = [0, 0], sizes = [1, 192], strides = [1, 1]} : vector<1x256xf32> to vector<1x192xf32>
    %71 = arith.negf %70 : vector<1x192xf32>
    %72 = math.exp %71 : vector<1x192xf32>
    %cst_19 = arith.constant 1.000000e+00 : f32
    %73 = vector.broadcast %cst_19 : f32 to vector<1x192xf32>
    %74 = arith.addf %73, %72 : vector<1x192xf32>
    %75 = arith.divf %73, %74 : vector<1x192xf32>
    %76 = vector.extract_strided_slice %69 {offsets = [0, 192], sizes = [1, 64], strides = [1, 1]} : vector<1x256xf32> to vector<1x64xf32>
    %77 = math.tanh %76 : vector<1x64xf32>
    %78 = vector.extract_strided_slice %75 {offsets = [0, 0], sizes = [1, 64], strides = [1, 1]} : vector<1x192xf32> to vector<1x64xf32>
    %79 = vector.extract_strided_slice %75 {offsets = [0, 64], sizes = [1, 64], strides = [1, 1]} : vector<1x192xf32> to vector<1x64xf32>
    %80 = vector.extract_strided_slice %75 {offsets = [0, 128], sizes = [1, 64], strides = [1, 1]} : vector<1x192xf32> to vector<1x64xf32>
    %81 = arith.mulf %79, %45 : vector<1x64xf32>
    %82 = arith.mulf %78, %77 : vector<1x64xf32>
    %83 = arith.addf %81, %82 : vector<1x64xf32>
    %84 = math.tanh %83 : vector<1x64xf32>
    %85 = arith.mulf %80, %84 : vector<1x64xf32>
    %86 = vector.extract_strided_slice %8 {offsets = [2, 0], sizes = [1, 256], strides = [1, 1]} : vector<8x256xf32> to vector<1x256xf32>
    %cst_20 = arith.constant dense<0.000000e+00> : vector<1x256xf32>
    %87 = tpu.matmul %66, %0, %cst_20 {dimension_numbers = #tpu.dot_dimension_numbers<[1], [0], [0], [1], [0, 0, 1, 1], [], []>} : vector<1x64xf32>, vector<64x256xf32>, vector<1x256xf32> -> vector<1x256xf32>
    %88 = arith.addf %86, %87 : vector<1x256xf32>
    %89 = vector.extract_strided_slice %88 {offsets = [0, 0], sizes = [1, 192], strides = [1, 1]} : vector<1x256xf32> to vector<1x192xf32>
    %90 = arith.negf %89 : vector<1x192xf32>
    %91 = math.exp %90 : vector<1x192xf32>
    %cst_21 = arith.constant 1.000000e+00 : f32
    %92 = vector.broadcast %cst_21 : f32 to vector<1x192xf32>
    %93 = arith.addf %92, %91 : vector<1x192xf32>
    %94 = arith.divf %92, %93 : vector<1x192xf32>
    %95 = vector.extract_strided_slice %88 {offsets = [0, 192], sizes = [1, 64], strides = [1, 1]} : vector<1x256xf32> to vector<1x64xf32>
    %96 = math.tanh %95 : vector<1x64xf32>
    %97 = vector.extract_strided_slice %94 {offsets = [0, 0], sizes = [1, 64], strides = [1, 1]} : vector<1x192xf32> to vector<1x64xf32>
    %98 = vector.extract_strided_slice %94 {offsets = [0, 64], sizes = [1, 64], strides = [1, 1]} : vector<1x192xf32> to vector<1x64xf32>
    %99 = vector.extract_strided_slice %94 {offsets = [0, 128], sizes = [1, 64], strides = [1, 1]} : vector<1x192xf32> to vector<1x64xf32>
    %100 = arith.mulf %98, %64 : vector<1x64xf32>
    %101 = arith.mulf %97, %96 : vector<1x64xf32>
    %102 = arith.addf %100, %101 : vector<1x64xf32>
    %103 = math.tanh %102 : vector<1x64xf32>
    %104 = arith.mulf %99, %103 : vector<1x64xf32>
    %105 = tpu.concatenate %104, %85 in 1 : vector<1x64xf32>, vector<1x64xf32> -> vector<1x128xf32>
    %cst_22 = arith.constant dense<0.000000e+00> : vector<1x256xf32>
    %106 = tpu.matmul %105, %1, %cst_22 {dimension_numbers = #tpu.dot_dimension_numbers<[1], [0], [0], [1], [0, 0, 1, 1], [], []>} : vector<1x128xf32>, vector<128x256xf32>, vector<1x256xf32> -> vector<1x256xf32>
    %107 = arith.addf %106, %2 : vector<1x256xf32>
    %108 = vector.extract_strided_slice %107 {offsets = [0, 0], sizes = [1, 192], strides = [1, 1]} : vector<1x256xf32> to vector<1x192xf32>
    %109 = arith.negf %108 : vector<1x192xf32>
    %110 = math.exp %109 : vector<1x192xf32>
    %cst_23 = arith.constant 1.000000e+00 : f32
    %111 = vector.broadcast %cst_23 : f32 to vector<1x192xf32>
    %112 = arith.addf %111, %110 : vector<1x192xf32>
    %113 = arith.divf %111, %112 : vector<1x192xf32>
    %114 = vector.extract_strided_slice %107 {offsets = [0, 192], sizes = [1, 64], strides = [1, 1]} : vector<1x256xf32> to vector<1x64xf32>
    %115 = math.tanh %114 : vector<1x64xf32>
    %116 = vector.extract_strided_slice %113 {offsets = [0, 0], sizes = [1, 64], strides = [1, 1]} : vector<1x192xf32> to vector<1x64xf32>
    %117 = vector.extract_strided_slice %113 {offsets = [0, 64], sizes = [1, 64], strides = [1, 1]} : vector<1x192xf32> to vector<1x64xf32>
    %118 = vector.extract_strided_slice %113 {offsets = [0, 128], sizes = [1, 64], strides = [1, 1]} : vector<1x192xf32> to vector<1x64xf32>
    %119 = arith.mulf %117, %83 : vector<1x64xf32>
    %120 = arith.mulf %116, %115 : vector<1x64xf32>
    %121 = arith.addf %119, %120 : vector<1x64xf32>
    %122 = math.tanh %121 : vector<1x64xf32>
    %123 = arith.mulf %118, %122 : vector<1x64xf32>
    %124 = vector.extract_strided_slice %8 {offsets = [3, 0], sizes = [1, 256], strides = [1, 1]} : vector<8x256xf32> to vector<1x256xf32>
    %cst_24 = arith.constant dense<0.000000e+00> : vector<1x256xf32>
    %125 = tpu.matmul %104, %0, %cst_24 {dimension_numbers = #tpu.dot_dimension_numbers<[1], [0], [0], [1], [0, 0, 1, 1], [], []>} : vector<1x64xf32>, vector<64x256xf32>, vector<1x256xf32> -> vector<1x256xf32>
    %126 = arith.addf %124, %125 : vector<1x256xf32>
    %127 = vector.extract_strided_slice %126 {offsets = [0, 0], sizes = [1, 192], strides = [1, 1]} : vector<1x256xf32> to vector<1x192xf32>
    %128 = arith.negf %127 : vector<1x192xf32>
    %129 = math.exp %128 : vector<1x192xf32>
    %cst_25 = arith.constant 1.000000e+00 : f32
    %130 = vector.broadcast %cst_25 : f32 to vector<1x192xf32>
    %131 = arith.addf %130, %129 : vector<1x192xf32>
    %132 = arith.divf %130, %131 : vector<1x192xf32>
    %133 = vector.extract_strided_slice %126 {offsets = [0, 192], sizes = [1, 64], strides = [1, 1]} : vector<1x256xf32> to vector<1x64xf32>
    %134 = math.tanh %133 : vector<1x64xf32>
    %135 = vector.extract_strided_slice %132 {offsets = [0, 0], sizes = [1, 64], strides = [1, 1]} : vector<1x192xf32> to vector<1x64xf32>
    %136 = vector.extract_strided_slice %132 {offsets = [0, 64], sizes = [1, 64], strides = [1, 1]} : vector<1x192xf32> to vector<1x64xf32>
    %137 = vector.extract_strided_slice %132 {offsets = [0, 128], sizes = [1, 64], strides = [1, 1]} : vector<1x192xf32> to vector<1x64xf32>
    %138 = arith.mulf %136, %102 : vector<1x64xf32>
    %139 = arith.mulf %135, %134 : vector<1x64xf32>
    %140 = arith.addf %138, %139 : vector<1x64xf32>
    %141 = math.tanh %140 : vector<1x64xf32>
    %142 = arith.mulf %137, %141 : vector<1x64xf32>
    %143 = tpu.concatenate %142, %123 in 1 : vector<1x64xf32>, vector<1x64xf32> -> vector<1x128xf32>
    %cst_26 = arith.constant dense<0.000000e+00> : vector<1x256xf32>
    %144 = tpu.matmul %143, %1, %cst_26 {dimension_numbers = #tpu.dot_dimension_numbers<[1], [0], [0], [1], [0, 0, 1, 1], [], []>} : vector<1x128xf32>, vector<128x256xf32>, vector<1x256xf32> -> vector<1x256xf32>
    %145 = arith.addf %144, %2 : vector<1x256xf32>
    %146 = vector.extract_strided_slice %145 {offsets = [0, 0], sizes = [1, 192], strides = [1, 1]} : vector<1x256xf32> to vector<1x192xf32>
    %147 = arith.negf %146 : vector<1x192xf32>
    %148 = math.exp %147 : vector<1x192xf32>
    %cst_27 = arith.constant 1.000000e+00 : f32
    %149 = vector.broadcast %cst_27 : f32 to vector<1x192xf32>
    %150 = arith.addf %149, %148 : vector<1x192xf32>
    %151 = arith.divf %149, %150 : vector<1x192xf32>
    %152 = vector.extract_strided_slice %145 {offsets = [0, 192], sizes = [1, 64], strides = [1, 1]} : vector<1x256xf32> to vector<1x64xf32>
    %153 = math.tanh %152 : vector<1x64xf32>
    %154 = vector.extract_strided_slice %151 {offsets = [0, 0], sizes = [1, 64], strides = [1, 1]} : vector<1x192xf32> to vector<1x64xf32>
    %155 = vector.extract_strided_slice %151 {offsets = [0, 64], sizes = [1, 64], strides = [1, 1]} : vector<1x192xf32> to vector<1x64xf32>
    %156 = vector.extract_strided_slice %151 {offsets = [0, 128], sizes = [1, 64], strides = [1, 1]} : vector<1x192xf32> to vector<1x64xf32>
    %157 = arith.mulf %155, %121 : vector<1x64xf32>
    %158 = arith.mulf %154, %153 : vector<1x64xf32>
    %159 = arith.addf %157, %158 : vector<1x64xf32>
    %160 = math.tanh %159 : vector<1x64xf32>
    %161 = arith.mulf %156, %160 : vector<1x64xf32>
    %162 = vector.extract_strided_slice %8 {offsets = [4, 0], sizes = [1, 256], strides = [1, 1]} : vector<8x256xf32> to vector<1x256xf32>
    %cst_28 = arith.constant dense<0.000000e+00> : vector<1x256xf32>
    %163 = tpu.matmul %142, %0, %cst_28 {dimension_numbers = #tpu.dot_dimension_numbers<[1], [0], [0], [1], [0, 0, 1, 1], [], []>} : vector<1x64xf32>, vector<64x256xf32>, vector<1x256xf32> -> vector<1x256xf32>
    %164 = arith.addf %162, %163 : vector<1x256xf32>
    %165 = vector.extract_strided_slice %164 {offsets = [0, 0], sizes = [1, 192], strides = [1, 1]} : vector<1x256xf32> to vector<1x192xf32>
    %166 = arith.negf %165 : vector<1x192xf32>
    %167 = math.exp %166 : vector<1x192xf32>
    %cst_29 = arith.constant 1.000000e+00 : f32
    %168 = vector.broadcast %cst_29 : f32 to vector<1x192xf32>
    %169 = arith.addf %168, %167 : vector<1x192xf32>
    %170 = arith.divf %168, %169 : vector<1x192xf32>
    %171 = vector.extract_strided_slice %164 {offsets = [0, 192], sizes = [1, 64], strides = [1, 1]} : vector<1x256xf32> to vector<1x64xf32>
    %172 = math.tanh %171 : vector<1x64xf32>
    %173 = vector.extract_strided_slice %170 {offsets = [0, 0], sizes = [1, 64], strides = [1, 1]} : vector<1x192xf32> to vector<1x64xf32>
    %174 = vector.extract_strided_slice %170 {offsets = [0, 64], sizes = [1, 64], strides = [1, 1]} : vector<1x192xf32> to vector<1x64xf32>
    %175 = vector.extract_strided_slice %170 {offsets = [0, 128], sizes = [1, 64], strides = [1, 1]} : vector<1x192xf32> to vector<1x64xf32>
    %176 = arith.mulf %174, %140 : vector<1x64xf32>
    %177 = arith.mulf %173, %172 : vector<1x64xf32>
    %178 = arith.addf %176, %177 : vector<1x64xf32>
    %179 = math.tanh %178 : vector<1x64xf32>
    %180 = arith.mulf %175, %179 : vector<1x64xf32>
    %181 = tpu.concatenate %180, %161 in 1 : vector<1x64xf32>, vector<1x64xf32> -> vector<1x128xf32>
    %cst_30 = arith.constant dense<0.000000e+00> : vector<1x256xf32>
    %182 = tpu.matmul %181, %1, %cst_30 {dimension_numbers = #tpu.dot_dimension_numbers<[1], [0], [0], [1], [0, 0, 1, 1], [], []>} : vector<1x128xf32>, vector<128x256xf32>, vector<1x256xf32> -> vector<1x256xf32>
    %183 = arith.addf %182, %2 : vector<1x256xf32>
    %184 = vector.extract_strided_slice %183 {offsets = [0, 0], sizes = [1, 192], strides = [1, 1]} : vector<1x256xf32> to vector<1x192xf32>
    %185 = arith.negf %184 : vector<1x192xf32>
    %186 = math.exp %185 : vector<1x192xf32>
    %cst_31 = arith.constant 1.000000e+00 : f32
    %187 = vector.broadcast %cst_31 : f32 to vector<1x192xf32>
    %188 = arith.addf %187, %186 : vector<1x192xf32>
    %189 = arith.divf %187, %188 : vector<1x192xf32>
    %190 = vector.extract_strided_slice %183 {offsets = [0, 192], sizes = [1, 64], strides = [1, 1]} : vector<1x256xf32> to vector<1x64xf32>
    %191 = math.tanh %190 : vector<1x64xf32>
    %192 = vector.extract_strided_slice %189 {offsets = [0, 0], sizes = [1, 64], strides = [1, 1]} : vector<1x192xf32> to vector<1x64xf32>
    %193 = vector.extract_strided_slice %189 {offsets = [0, 64], sizes = [1, 64], strides = [1, 1]} : vector<1x192xf32> to vector<1x64xf32>
    %194 = vector.extract_strided_slice %189 {offsets = [0, 128], sizes = [1, 64], strides = [1, 1]} : vector<1x192xf32> to vector<1x64xf32>
    %195 = arith.mulf %193, %159 : vector<1x64xf32>
    %196 = arith.mulf %192, %191 : vector<1x64xf32>
    %197 = arith.addf %195, %196 : vector<1x64xf32>
    %198 = math.tanh %197 : vector<1x64xf32>
    %199 = arith.mulf %194, %198 : vector<1x64xf32>
    %200 = vector.extract_strided_slice %8 {offsets = [5, 0], sizes = [1, 256], strides = [1, 1]} : vector<8x256xf32> to vector<1x256xf32>
    %cst_32 = arith.constant dense<0.000000e+00> : vector<1x256xf32>
    %201 = tpu.matmul %180, %0, %cst_32 {dimension_numbers = #tpu.dot_dimension_numbers<[1], [0], [0], [1], [0, 0, 1, 1], [], []>} : vector<1x64xf32>, vector<64x256xf32>, vector<1x256xf32> -> vector<1x256xf32>
    %202 = arith.addf %200, %201 : vector<1x256xf32>
    %203 = vector.extract_strided_slice %202 {offsets = [0, 0], sizes = [1, 192], strides = [1, 1]} : vector<1x256xf32> to vector<1x192xf32>
    %204 = arith.negf %203 : vector<1x192xf32>
    %205 = math.exp %204 : vector<1x192xf32>
    %cst_33 = arith.constant 1.000000e+00 : f32
    %206 = vector.broadcast %cst_33 : f32 to vector<1x192xf32>
    %207 = arith.addf %206, %205 : vector<1x192xf32>
    %208 = arith.divf %206, %207 : vector<1x192xf32>
    %209 = vector.extract_strided_slice %202 {offsets = [0, 192], sizes = [1, 64], strides = [1, 1]} : vector<1x256xf32> to vector<1x64xf32>
    %210 = math.tanh %209 : vector<1x64xf32>
    %211 = vector.extract_strided_slice %208 {offsets = [0, 0], sizes = [1, 64], strides = [1, 1]} : vector<1x192xf32> to vector<1x64xf32>
    %212 = vector.extract_strided_slice %208 {offsets = [0, 64], sizes = [1, 64], strides = [1, 1]} : vector<1x192xf32> to vector<1x64xf32>
    %213 = vector.extract_strided_slice %208 {offsets = [0, 128], sizes = [1, 64], strides = [1, 1]} : vector<1x192xf32> to vector<1x64xf32>
    %214 = arith.mulf %212, %178 : vector<1x64xf32>
    %215 = arith.mulf %211, %210 : vector<1x64xf32>
    %216 = arith.addf %214, %215 : vector<1x64xf32>
    %217 = math.tanh %216 : vector<1x64xf32>
    %218 = arith.mulf %213, %217 : vector<1x64xf32>
    %219 = tpu.concatenate %218, %199 in 1 : vector<1x64xf32>, vector<1x64xf32> -> vector<1x128xf32>
    %cst_34 = arith.constant dense<0.000000e+00> : vector<1x256xf32>
    %220 = tpu.matmul %219, %1, %cst_34 {dimension_numbers = #tpu.dot_dimension_numbers<[1], [0], [0], [1], [0, 0, 1, 1], [], []>} : vector<1x128xf32>, vector<128x256xf32>, vector<1x256xf32> -> vector<1x256xf32>
    %221 = arith.addf %220, %2 : vector<1x256xf32>
    %222 = vector.extract_strided_slice %221 {offsets = [0, 0], sizes = [1, 192], strides = [1, 1]} : vector<1x256xf32> to vector<1x192xf32>
    %223 = arith.negf %222 : vector<1x192xf32>
    %224 = math.exp %223 : vector<1x192xf32>
    %cst_35 = arith.constant 1.000000e+00 : f32
    %225 = vector.broadcast %cst_35 : f32 to vector<1x192xf32>
    %226 = arith.addf %225, %224 : vector<1x192xf32>
    %227 = arith.divf %225, %226 : vector<1x192xf32>
    %228 = vector.extract_strided_slice %221 {offsets = [0, 192], sizes = [1, 64], strides = [1, 1]} : vector<1x256xf32> to vector<1x64xf32>
    %229 = math.tanh %228 : vector<1x64xf32>
    %230 = vector.extract_strided_slice %227 {offsets = [0, 0], sizes = [1, 64], strides = [1, 1]} : vector<1x192xf32> to vector<1x64xf32>
    %231 = vector.extract_strided_slice %227 {offsets = [0, 64], sizes = [1, 64], strides = [1, 1]} : vector<1x192xf32> to vector<1x64xf32>
    %232 = vector.extract_strided_slice %227 {offsets = [0, 128], sizes = [1, 64], strides = [1, 1]} : vector<1x192xf32> to vector<1x64xf32>
    %233 = arith.mulf %231, %197 : vector<1x64xf32>
    %234 = arith.mulf %230, %229 : vector<1x64xf32>
    %235 = arith.addf %233, %234 : vector<1x64xf32>
    %236 = math.tanh %235 : vector<1x64xf32>
    %237 = arith.mulf %232, %236 : vector<1x64xf32>
    %238 = vector.extract_strided_slice %8 {offsets = [6, 0], sizes = [1, 256], strides = [1, 1]} : vector<8x256xf32> to vector<1x256xf32>
    %cst_36 = arith.constant dense<0.000000e+00> : vector<1x256xf32>
    %239 = tpu.matmul %218, %0, %cst_36 {dimension_numbers = #tpu.dot_dimension_numbers<[1], [0], [0], [1], [0, 0, 1, 1], [], []>} : vector<1x64xf32>, vector<64x256xf32>, vector<1x256xf32> -> vector<1x256xf32>
    %240 = arith.addf %238, %239 : vector<1x256xf32>
    %241 = vector.extract_strided_slice %240 {offsets = [0, 0], sizes = [1, 192], strides = [1, 1]} : vector<1x256xf32> to vector<1x192xf32>
    %242 = arith.negf %241 : vector<1x192xf32>
    %243 = math.exp %242 : vector<1x192xf32>
    %cst_37 = arith.constant 1.000000e+00 : f32
    %244 = vector.broadcast %cst_37 : f32 to vector<1x192xf32>
    %245 = arith.addf %244, %243 : vector<1x192xf32>
    %246 = arith.divf %244, %245 : vector<1x192xf32>
    %247 = vector.extract_strided_slice %240 {offsets = [0, 192], sizes = [1, 64], strides = [1, 1]} : vector<1x256xf32> to vector<1x64xf32>
    %248 = math.tanh %247 : vector<1x64xf32>
    %249 = vector.extract_strided_slice %246 {offsets = [0, 0], sizes = [1, 64], strides = [1, 1]} : vector<1x192xf32> to vector<1x64xf32>
    %250 = vector.extract_strided_slice %246 {offsets = [0, 64], sizes = [1, 64], strides = [1, 1]} : vector<1x192xf32> to vector<1x64xf32>
    %251 = vector.extract_strided_slice %246 {offsets = [0, 128], sizes = [1, 64], strides = [1, 1]} : vector<1x192xf32> to vector<1x64xf32>
    %252 = arith.mulf %250, %216 : vector<1x64xf32>
    %253 = arith.mulf %249, %248 : vector<1x64xf32>
    %254 = arith.addf %252, %253 : vector<1x64xf32>
    %255 = math.tanh %254 : vector<1x64xf32>
    %256 = arith.mulf %251, %255 : vector<1x64xf32>
    %257 = tpu.concatenate %256, %237 in 1 : vector<1x64xf32>, vector<1x64xf32> -> vector<1x128xf32>
    %cst_38 = arith.constant dense<0.000000e+00> : vector<1x256xf32>
    %258 = tpu.matmul %257, %1, %cst_38 {dimension_numbers = #tpu.dot_dimension_numbers<[1], [0], [0], [1], [0, 0, 1, 1], [], []>} : vector<1x128xf32>, vector<128x256xf32>, vector<1x256xf32> -> vector<1x256xf32>
    %259 = arith.addf %258, %2 : vector<1x256xf32>
    %260 = vector.extract_strided_slice %259 {offsets = [0, 0], sizes = [1, 192], strides = [1, 1]} : vector<1x256xf32> to vector<1x192xf32>
    %261 = arith.negf %260 : vector<1x192xf32>
    %262 = math.exp %261 : vector<1x192xf32>
    %cst_39 = arith.constant 1.000000e+00 : f32
    %263 = vector.broadcast %cst_39 : f32 to vector<1x192xf32>
    %264 = arith.addf %263, %262 : vector<1x192xf32>
    %265 = arith.divf %263, %264 : vector<1x192xf32>
    %266 = vector.extract_strided_slice %259 {offsets = [0, 192], sizes = [1, 64], strides = [1, 1]} : vector<1x256xf32> to vector<1x64xf32>
    %267 = math.tanh %266 : vector<1x64xf32>
    %268 = vector.extract_strided_slice %265 {offsets = [0, 0], sizes = [1, 64], strides = [1, 1]} : vector<1x192xf32> to vector<1x64xf32>
    %269 = vector.extract_strided_slice %265 {offsets = [0, 64], sizes = [1, 64], strides = [1, 1]} : vector<1x192xf32> to vector<1x64xf32>
    %270 = vector.extract_strided_slice %265 {offsets = [0, 128], sizes = [1, 64], strides = [1, 1]} : vector<1x192xf32> to vector<1x64xf32>
    %271 = arith.mulf %269, %235 : vector<1x64xf32>
    %272 = arith.mulf %268, %267 : vector<1x64xf32>
    %273 = arith.addf %271, %272 : vector<1x64xf32>
    %274 = math.tanh %273 : vector<1x64xf32>
    %275 = arith.mulf %270, %274 : vector<1x64xf32>
    %276 = vector.extract_strided_slice %8 {offsets = [7, 0], sizes = [1, 256], strides = [1, 1]} : vector<8x256xf32> to vector<1x256xf32>
    %cst_40 = arith.constant dense<0.000000e+00> : vector<1x256xf32>
    %277 = tpu.matmul %256, %0, %cst_40 {dimension_numbers = #tpu.dot_dimension_numbers<[1], [0], [0], [1], [0, 0, 1, 1], [], []>} : vector<1x64xf32>, vector<64x256xf32>, vector<1x256xf32> -> vector<1x256xf32>
    %278 = arith.addf %276, %277 : vector<1x256xf32>
    %279 = vector.extract_strided_slice %278 {offsets = [0, 0], sizes = [1, 192], strides = [1, 1]} : vector<1x256xf32> to vector<1x192xf32>
    %280 = arith.negf %279 : vector<1x192xf32>
    %281 = math.exp %280 : vector<1x192xf32>
    %cst_41 = arith.constant 1.000000e+00 : f32
    %282 = vector.broadcast %cst_41 : f32 to vector<1x192xf32>
    %283 = arith.addf %282, %281 : vector<1x192xf32>
    %284 = arith.divf %282, %283 : vector<1x192xf32>
    %285 = vector.extract_strided_slice %278 {offsets = [0, 192], sizes = [1, 64], strides = [1, 1]} : vector<1x256xf32> to vector<1x64xf32>
    %286 = math.tanh %285 : vector<1x64xf32>
    %287 = vector.extract_strided_slice %284 {offsets = [0, 0], sizes = [1, 64], strides = [1, 1]} : vector<1x192xf32> to vector<1x64xf32>
    %288 = vector.extract_strided_slice %284 {offsets = [0, 64], sizes = [1, 64], strides = [1, 1]} : vector<1x192xf32> to vector<1x64xf32>
    %289 = vector.extract_strided_slice %284 {offsets = [0, 128], sizes = [1, 64], strides = [1, 1]} : vector<1x192xf32> to vector<1x64xf32>
    %290 = arith.mulf %288, %254 : vector<1x64xf32>
    %291 = arith.mulf %287, %286 : vector<1x64xf32>
    %292 = arith.addf %290, %291 : vector<1x64xf32>
    %293 = math.tanh %292 : vector<1x64xf32>
    %294 = arith.mulf %289, %293 : vector<1x64xf32>
    %295 = tpu.concatenate %294, %275 in 1 : vector<1x64xf32>, vector<1x64xf32> -> vector<1x128xf32>
    %cst_42 = arith.constant dense<0.000000e+00> : vector<1x256xf32>
    %296 = tpu.matmul %295, %1, %cst_42 {dimension_numbers = #tpu.dot_dimension_numbers<[1], [0], [0], [1], [0, 0, 1, 1], [], []>} : vector<1x128xf32>, vector<128x256xf32>, vector<1x256xf32> -> vector<1x256xf32>
    %297 = arith.addf %296, %2 : vector<1x256xf32>
    %298 = vector.extract_strided_slice %297 {offsets = [0, 0], sizes = [1, 192], strides = [1, 1]} : vector<1x256xf32> to vector<1x192xf32>
    %299 = arith.negf %298 : vector<1x192xf32>
    %300 = math.exp %299 : vector<1x192xf32>
    %cst_43 = arith.constant 1.000000e+00 : f32
    %301 = vector.broadcast %cst_43 : f32 to vector<1x192xf32>
    %302 = arith.addf %301, %300 : vector<1x192xf32>
    %303 = arith.divf %301, %302 : vector<1x192xf32>
    %304 = vector.extract_strided_slice %297 {offsets = [0, 192], sizes = [1, 64], strides = [1, 1]} : vector<1x256xf32> to vector<1x64xf32>
    %305 = math.tanh %304 : vector<1x64xf32>
    %306 = vector.extract_strided_slice %303 {offsets = [0, 0], sizes = [1, 64], strides = [1, 1]} : vector<1x192xf32> to vector<1x64xf32>
    %307 = vector.extract_strided_slice %303 {offsets = [0, 64], sizes = [1, 64], strides = [1, 1]} : vector<1x192xf32> to vector<1x64xf32>
    %308 = vector.extract_strided_slice %303 {offsets = [0, 128], sizes = [1, 64], strides = [1, 1]} : vector<1x192xf32> to vector<1x64xf32>
    %309 = arith.mulf %307, %273 : vector<1x64xf32>
    %310 = arith.mulf %306, %305 : vector<1x64xf32>
    %311 = arith.addf %309, %310 : vector<1x64xf32>
    %312 = math.tanh %311 : vector<1x64xf32>
    %313 = arith.mulf %308, %312 : vector<1x64xf32>
    %314 = tpu.concatenate %47, %85, %123, %161, %199, %237, %275, %313 in 0 : vector<1x64xf32>, vector<1x64xf32>, vector<1x64xf32>, vector<1x64xf32>, vector<1x64xf32>, vector<1x64xf32>, vector<1x64xf32>, vector<1x64xf32> -> vector<8x64xf32>
    %c0_44 = arith.constant 0 : index
    %c0_45 = arith.constant 0 : index
    %315 = vector.load %arg6[%c0_44, %c0_45] : memref<64x2xf32, #tpu.memory_space<vmem>>, vector<64x2xf32>
    %cst_46 = arith.constant dense<0.000000e+00> : vector<8x2xf32>
    %316 = tpu.matmul %314, %315, %cst_46 {dimension_numbers = #tpu.dot_dimension_numbers<[1], [0], [0], [1], [0, 0, 1, 1], [], []>} : vector<8x64xf32>, vector<64x2xf32>, vector<8x2xf32> -> vector<8x2xf32>
    %c0_47 = arith.constant 0 : index
    %c0_48 = arith.constant 0 : index
    %317 = vector.load %arg7[%c0_47, %c0_48] : memref<1x2xf32, #tpu.memory_space<vmem>>, vector<1x2xf32>
    %318 = vector.broadcast %317 : vector<1x2xf32> to vector<8x2xf32>
    %319 = arith.addf %316, %318 : vector<8x2xf32>
    %320 = vector.extract_strided_slice %319 {offsets = [0, 0], sizes = [8, 1], strides = [1, 1]} : vector<8x2xf32> to vector<8x1xf32>
    %c0_49 = arith.constant 0 : index
    %c0_50 = arith.constant 0 : index
    %321 = vector.load %arg8[%c0_49, %c0_50] : memref<8x1xf32, #tpu.memory_space<vmem>>, vector<8x1xf32>
    tpu.vector_store %arg8[%c0_49, %c0_50], %320 {strides = array<i32>} : memref<8x1xf32, #tpu.memory_space<vmem>>, vector<8x1xf32>,
    %322 = vector.extract_strided_slice %319 {offsets = [0, 1], sizes = [8, 1], strides = [1, 1]} : vector<8x2xf32> to vector<8x1xf32>
    %c0_51 = arith.constant 0 : index
    %c0_52 = arith.constant 0 : index
    %323 = vector.load %arg9[%c0_51, %c0_52] : memref<8x1xf32, #tpu.memory_space<vmem>>, vector<8x1xf32>
    tpu.vector_store %arg9[%c0_51, %c0_52], %322 {strides = array<i32>} : memref<8x1xf32, #tpu.memory_space<vmem>>, vector<8x1xf32>,
    return
  }
}

</mosaic_0001>

<llo_original>
// kernel: tpu_custom_call.1
$region0: #{tpu_custom_call.1}
  #allocation0 [shape = 'u32[]', space=smem, size = 0x4, offset = 0x4, fixed_abs, tag = 'smem constant byte address 0x4 - core index']
  #allocation1 [shape = 'u32[72,128]{1,0:T(1,128)}', space=vmem, size = 0x9000, scoped, tag = 'internal scratch']
  %s0 = inlined_call_operand.vmem [shape: f32[8,16], index: 0, kind: input, shape index: {}]
  %s1 = inlined_call_operand.vmem [shape: f32[16,256], index: 1, kind: input, shape index: {}]
  %s2 = inlined_call_operand.vmem [shape: f32[1,256], index: 2, kind: input, shape index: {}]
  %s3 = inlined_call_operand.hbm [shape: f32[64,256], index: 3, kind: input, shape index: {}]
  %s4 = inlined_call_operand.hbm [shape: f32[128,256], index: 4, kind: input, shape index: {}]
  %s5 = inlined_call_operand.vmem [shape: f32[1,256], index: 5, kind: input, shape index: {}]
  %s6 = inlined_call_operand.vmem [shape: f32[64,2], index: 6, kind: input, shape index: {}]
  %s7 = inlined_call_operand.vmem [shape: f32[1,2], index: 7, kind: input, shape index: {}]
  %s8 = inlined_call_operand.vmem [shape: f32[8,1], index: 8, kind: output, shape index: {0}]
  %s9 = inlined_call_operand.vmem [shape: f32[8,1], index: 9, kind: output, shape index: {1}]
  %10 = xla_tuple %s8, %s9
  %s11 = sld [smem:[#allocation0]]
  $region58: #{tpu_custom_call.1} parent=0
    _
  %s13 = ssub.s32 1, %s11
  %s14 = scalar_select 0, %s13, %s11
  $region1: #{tpu_custom_call.1} parent=0
    #allocation2 [shape = 'u8[65536]{0}', space=vmem, size = 0x10000, scoped, tag = 'input window, operand 3, single buffered']
    #allocation3 [shape = 's32[1]{0}', space=sflag, size = 0x4, scoped, tag = 'scoped memory for tpu_custom_call.1']
    #allocation4 [shape = 'u8[131072]{0}', space=vmem, size = 0x20000, scoped, tag = 'input window, operand 4, single buffered']
    #allocation5 [shape = 's32[1]{0}', space=sflag, size = 0x4, scoped, tag = 'scoped memory for tpu_custom_call.1']
    %15 = vsyncpa [#allocation3], 0
    %16 = vsyncpa [#allocation5], 0
    // Predicated region
    $region2: #{tpu_custom_call.1} parent=1 // pred_check
      _
    $region3: #{tpu_custom_call.1} parent=1 // pred_check_branch
      %18 = sbr.rel (0) target = $region5
    $region4: #{tpu_custom_call.1} parent=1 // pred_region
      _
    $region5: #{tpu_custom_call.1} parent=1 // pred_fallthru
      _
    // Predicated region
    $region6: #{tpu_custom_call.1} parent=1 // pred_check
      _
    $region7: #{tpu_custom_call.1} parent=1 // pred_check_branch
      %20 = sbr.rel (0) target = $region9
    $region8: #{tpu_custom_call.1} parent=1 // pred_region
      _
    $region9: #{tpu_custom_call.1} parent=1 // pred_fallthru
      _
    // Predicated region
    $region10: #{tpu_custom_call.1} parent=1 // pred_check
      _
    $region11: #{tpu_custom_call.1} parent=1 // pred_check_branch
      %22 = sbr.rel (0) target = $region13
    $region12: #{tpu_custom_call.1} parent=1 // pred_region
      _
    $region13: #{tpu_custom_call.1} parent=1 // pred_fallthru
      _
    // Predicated region
    $region14: #{tpu_custom_call.1} parent=1 // pred_check
      _
    $region15: #{tpu_custom_call.1} parent=1 // pred_check_branch
      %24 = sbr.rel (0) target = $region17
    $region16: #{tpu_custom_call.1} parent=1 // pred_region
      %26 = vsyncadd [#allocation3], 0
      %s27 = sshll.u32 %s3, 4
      %s28 = int_to_ptr.hbm [resolvable:$true] %s27
      %s29 = sshll.u32 [#allocation2], 4
      %s30 = int_to_ptr.vmem [resolvable:$true] %s29
      %35 = dma.hbm_to_vmem [thread:$0]  %s28, 2048, %s30, [#allocation3], 256, 256, 16
    $region17: #{tpu_custom_call.1} parent=1 // pred_fallthru
      _
    // Predicated region
    $region18: #{tpu_custom_call.1} parent=1 // pred_check
      _
    $region19: #{tpu_custom_call.1} parent=1 // pred_check_branch
      %37 = sbr.rel (0) target = $region21
    $region20: #{tpu_custom_call.1} parent=1 // pred_region
      %39 = vsyncadd [#allocation5], 0
      %s40 = sshll.u32 %s4, 4
      %s41 = int_to_ptr.hbm [resolvable:$true] %s40
      %s42 = sshll.u32 [#allocation4], 4
      %s43 = int_to_ptr.vmem [resolvable:$true] %s42
      %48 = dma.hbm_to_vmem [thread:$0]  %s41, 4096, %s43, [#allocation5], 256, 256, 16
    $region21: #{tpu_custom_call.1} parent=1 // pred_fallthru
      _
    // Predicated region
    $region22: #{tpu_custom_call.1} parent=1 // pred_check
      _
    $region23: #{tpu_custom_call.1} parent=1 // pred_check_branch
      %50 = sbr.rel (0) target = $region25
    $region24: #{tpu_custom_call.1} parent=1 // pred_region
      _
    $region25: #{tpu_custom_call.1} parent=1 // pred_fallthru
      _
    // Predicated region
    $region26: #{tpu_custom_call.1} parent=1 // pred_check
      _
    $region27: #{tpu_custom_call.1} parent=1 // pred_check_branch
      %52 = sbr.rel (0) target = $region29
    $region28: #{tpu_custom_call.1} parent=1 // pred_region
      _
    $region29: #{tpu_custom_call.1} parent=1 // pred_fallthru
      _
    // Predicated region
    $region30: #{tpu_custom_call.1} parent=1 // pred_check
      _
    $region31: #{tpu_custom_call.1} parent=1 // pred_check_branch
      %54 = sbr.rel (0) target = $region33
    $region32: #{tpu_custom_call.1} parent=1 // pred_region
      _
    $region33: #{tpu_custom_call.1} parent=1 // pred_fallthru
      _
    // Predicated region
    $region34: #{tpu_custom_call.1} parent=1 // pred_check
      _
    $region35: #{tpu_custom_call.1} parent=1 // pred_check_branch
      %56 = sbr.rel (0) target = $region37
    $region36: #{tpu_custom_call.1} parent=1 // pred_region
      %58 = dma.done [#allocation3], 2048
    $region37: #{tpu_custom_call.1} parent=1 // pred_fallthru
      _
    // Predicated region
    $region38: #{tpu_custom_call.1} parent=1 // pred_check
      _
    $region39: #{tpu_custom_call.1} parent=1 // pred_check_branch
      %60 = sbr.rel (0) target = $region41
    $region40: #{tpu_custom_call.1} parent=1 // pred_region
      %62 = dma.done [#allocation5], 4096
    $region41: #{tpu_custom_call.1} parent=1 // pred_fallthru
      _
    %v63 = vld [vmem:[#allocation2] sm:$0xff]
    %v64 = vld [vmem:[#allocation2 + $0x8] sm:$0xff]
    %v65 = vld [vmem:[#allocation2 + $0x10] sm:$0xff]
    %v66 = vld [vmem:[#allocation2 + $0x18] sm:$0xff]
    %v67 = vld [vmem:[#allocation2 + $0x20] sm:$0xff]
    %v68 = vld [vmem:[#allocation2 + $0x28] sm:$0xff]
    %v69 = vld [vmem:[#allocation2 + $0x30] sm:$0xff]
    %v70 = vld [vmem:[#allocation2 + $0x38] sm:$0xff]
    %v71 = vld [vmem:[#allocation2 + $0x40] sm:$0xff]
    %v72 = vld [vmem:[#allocation2 + $0x48] sm:$0xff]
    %v73 = vld [vmem:[#allocation2 + $0x50] sm:$0xff]
    %v74 = vld [vmem:[#allocation2 + $0x58] sm:$0xff]
    %v75 = vld [vmem:[#allocation2 + $0x60] sm:$0xff]
    %v76 = vld [vmem:[#allocation2 + $0x68] sm:$0xff]
    %v77 = vld [vmem:[#allocation2 + $0x70] sm:$0xff]
    %v78 = vld [vmem:[#allocation2 + $0x78] sm:$0xff]
    %v79 = vld [vmem:[#allocation4] sm:$0xff]
    %v80 = vld [vmem:[#allocation4 + $0x8] sm:$0xff]
    %v81 = vld [vmem:[#allocation4 + $0x10] sm:$0xff]
    %v82 = vld [vmem:[#allocation4 + $0x18] sm:$0xff]
    %v83 = vld [vmem:[#allocation4 + $0x20] sm:$0xff]
    %v84 = vld [vmem:[#allocation4 + $0x28] sm:$0xff]
    %v85 = vld [vmem:[#allocation4 + $0x30] sm:$0xff]
    %v86 = vld [vmem:[#allocation4 + $0x38] sm:$0xff]
    %v87 = vld [vmem:[#allocation4 + $0x40] sm:$0xff]
    %v88 = vld [vmem:[#allocation4 + $0x48] sm:$0xff]
    %v89 = vld [vmem:[#allocation4 + $0x50] sm:$0xff]
    %v90 = vld [vmem:[#allocation4 + $0x58] sm:$0xff]
    %v91 = vld [vmem:[#allocation4 + $0x60] sm:$0xff]
    %v92 = vld [vmem:[#allocation4 + $0x68] sm:$0xff]
    %v93 = vld [vmem:[#allocation4 + $0x70] sm:$0xff]
    %v94 = vld [vmem:[#allocation4 + $0x78] sm:$0xff]
    %v95 = vld [vmem:[#allocation4 + $0x80] sm:$0xff]
    %v96 = vld [vmem:[#allocation4 + $0x88] sm:$0xff]
    %v97 = vld [vmem:[#allocation4 + $0x90] sm:$0xff]
    %v98 = vld [vmem:[#allocation4 + $0x98] sm:$0xff]
    %v99 = vld [vmem:[#allocation4 + $0xa0] sm:$0xff]
    %v100 = vld [vmem:[#allocation4 + $0xa8] sm:$0xff]
    %v101 = vld [vmem:[#allocation4 + $0xb0] sm:$0xff]
    %v102 = vld [vmem:[#allocation4 + $0xb8] sm:$0xff]
    %v103 = vld [vmem:[#allocation4 + $0xc0] sm:$0xff]
    %v104 = vld [vmem:[#allocation4 + $0xc8] sm:$0xff]
    %v105 = vld [vmem:[#allocation4 + $0xd0] sm:$0xff]
    %v106 = vld [vmem:[#allocation4 + $0xd8] sm:$0xff]
    %v107 = vld [vmem:[#allocation4 + $0xe0] sm:$0xff]
    %v108 = vld [vmem:[#allocation4 + $0xe8] sm:$0xff]
    %v109 = vld [vmem:[#allocation4 + $0xf0] sm:$0xff]
    %v110 = vld [vmem:[#allocation4 + $0xf8] sm:$0xff]
    %v111 = vld [vmem:[%s5] sm:$0x3]
    %v112 = vld [vmem:[%s0] sm:$0xff]
    %v113 = vld [vmem:[%s1] sm:$0xff]
    %v114 = vld [vmem:[%s1 + $0x8] sm:$0xff]
    %v115 = vld [vmem:[%s1 + $0x10] sm:$0xff]
    %v116 = vld [vmem:[%s1 + $0x18] sm:$0xff]
    %v117 = vld [vmem:[%s2] sm:$0x3]
    %v119 = vperm.slane %v117, 0
    %v120 = vperm.slane %v117, 1
    %vm123 = vcmask 130048
    %v125 = vsel %vm123, %v112, 0
    %127 = vmatpush.msra.mxu0 0.0
    %128 = vmatpush.msra.mxu0 0.0
    %129 = vmatpush.msra.mxu0 0.0
    %130 = vmatpush.msra.mxu0 0.0
    %131 = vmatpush.msra.mxu0 0.0
    %132 = vmatpush.msra.mxu0 0.0
    %133 = vmatpush.msra.mxu0 0.0
    %134 = vmatpush.msra.mxu0 0.0
    %135 = vmatpush.msra.mxu0 0.0
    %136 = vmatpush.msra.mxu0 0.0
    %137 = vmatpush.msra.mxu0 0.0
    %138 = vmatpush.msra.mxu0 0.0
    %139 = vmatpush.msra.mxu0 0.0
    %140 = vmatpush.msra.mxu0 0.0
    %141 = vmatpush.msra.mxu0 %v115
    %142 = vmatpush.msra.mxu0 %v113
    %143 = vmatmul.f32.gmra.mxu0 %v125
    %v144 = vpop.f32.mrf.mxu0
    %v145 = vadd.f32 %v119, %v144
    %146 = vdwg.mxu0
    %147 = vmatpush.msra.mxu0 0.0
    %148 = vmatpush.msra.mxu0 0.0
    %149 = vmatpush.msra.mxu0 0.0
    %150 = vmatpush.msra.mxu0 0.0
    %151 = vmatpush.msra.mxu0 0.0
    %152 = vmatpush.msra.mxu0 0.0
    %153 = vmatpush.msra.mxu0 0.0
    %154 = vmatpush.msra.mxu0 0.0
    %155 = vmatpush.msra.mxu0 0.0
    %156 = vmatpush.msra.mxu0 0.0
    %157 = vmatpush.msra.mxu0 0.0
    %158 = vmatpush.msra.mxu0 0.0
    %159 = vmatpush.msra.mxu0 0.0
    %160 = vmatpush.msra.mxu0 0.0
    %161 = vmatpush.msra.mxu0 %v116
    %162 = vmatpush.msra.mxu0 %v114
    %163 = vmatmul.f32.gmra.mxu0 %v125
    %v164 = vpop.f32.mrf.mxu0
    %v165 = vadd.f32 %v120, %v164
    %166 = vdwg.mxu0
    %vm167 = vcmask 523264
    %v169 = vsel %vm167, 0.0, 0
    %171 = vmatpush.msra.mxu0 0.0
    %172 = vmatpush.msra.mxu0 0.0
    %173 = vmatpush.msra.mxu0 0.0
    %174 = vmatpush.msra.mxu0 0.0
    %175 = vmatpush.msra.mxu0 0.0
    %176 = vmatpush.msra.mxu0 0.0
    %177 = vmatpush.msra.mxu0 0.0
    %178 = vmatpush.msra.mxu0 0.0
    %179 = vmatpush.msra.mxu0 %v77
    %180 = vmatpush.msra.mxu0 %v75
    %181 = vmatpush.msra.mxu0 %v73
    %182 = vmatpush.msra.mxu0 %v71
    %183 = vmatpush.msra.mxu0 %v69
    %184 = vmatpush.msra.mxu0 %v67
    %185 = vmatpush.msra.mxu0 %v65
    %186 = vmatpush.msra.mxu0 %v63
    %187 = vmatmul.f32.gmra.mxu0 %v169
    %v188 = vpop.f32.mrf.mxu0
    %v189 = vadd.f32 0.0, %v188
    %190 = vdwg.mxu0
    %191 = vmatpush.msra.mxu0 0.0
    %192 = vmatpush.msra.mxu0 0.0
    %193 = vmatpush.msra.mxu0 0.0
    %194 = vmatpush.msra.mxu0 0.0
    %195 = vmatpush.msra.mxu0 0.0
    %196 = vmatpush.msra.mxu0 0.0
    %197 = vmatpush.msra.mxu0 0.0
    %198 = vmatpush.msra.mxu0 0.0
    %199 = vmatpush.msra.mxu0 %v78
    %200 = vmatpush.msra.mxu0 %v76
    %201 = vmatpush.msra.mxu0 %v74
    %202 = vmatpush.msra.mxu0 %v72
    %203 = vmatpush.msra.mxu0 %v70
    %204 = vmatpush.msra.mxu0 %v68
    %205 = vmatpush.msra.mxu0 %v66
    %206 = vmatpush.msra.mxu0 %v64
    %207 = vmatmul.f32.gmra.mxu0 %v169
    %v208 = vpop.f32.mrf.mxu0
    %v209 = vadd.f32 0.0, %v208
    %210 = vdwg.mxu0
    %v211 = vadd.f32 %v145, %v189
    %v212 = vadd.f32 %v165, %v209
    %v213 = vxor.u32 %v211, 2147483648
    %v214 = vxor.u32 %v212, 2147483648
    %v215 = vmul.f32 %v213, 1.442695
    %v216 = vpow.pop %v215
    %v217 = vmul.f32 %v214, 1.442695
    %v218 = vpow.pop %v217
    %v219 = vadd.f32 %v216, 1.0
    %v220 = vadd.f32 %v218, 1.0
    %v221 = vrcp.pop %v219
    %v222 = vmul.f32 %v219, %v221
    %v223 = vsub.f32 1.0, %v222
    %v224 = vmul.f32 %v221, %v223
    %v225 = vadd.f32 %v221, %v224
    %vm226 = vweird.f32 %v219
    %vm227 = vweird.f32 %v221
    %vm228 = vmor %vm226, %vm227
    %v229 = vsel %vm228, %v221, %v225
    %v230 = vand.u32 2147483647, %v219
    %vm231 = vcmp.eq.f32.partialorder %v230, 8.507059e+37
    %v232 = vand.u32 %v219, 2147483648
    %v233 = vor.u32 1.1754944e-38, %v232
    %v234 = vsel %vm231, %v233, %v229
    %v235 = vmul.f32 1.0, %v234
    %v236 = vrcp.pop %v220
    %v237 = vmul.f32 %v220, %v236
    %v238 = vsub.f32 1.0, %v237
    %v239 = vmul.f32 %v236, %v238
    %v240 = vadd.f32 %v236, %v239
    %vm241 = vweird.f32 %v220
    %vm242 = vweird.f32 %v236
    %vm243 = vmor %vm241, %vm242
    %v244 = vsel %vm243, %v236, %v240
    %v245 = vand.u32 2147483647, %v220
    %vm246 = vcmp.eq.f32.partialorder %v245, 8.507059e+37
    %v247 = vand.u32 %v220, 2147483648
    %v248 = vor.u32 1.1754944e-38, %v247
    %v249 = vsel %vm246, %v248, %v244
    %v250 = vmul.f32 1.0, %v249
    %v251 = vtanh.pop %v212
    %v252 = vmul.f32 %v235, 0.0
    %254 = vrot.lane.b32.xlu0 %v251, 64
    %v255 = vpop.permute.xlu0 %254
    %v257 = vmul.f32 %v235, %v255
    %259 = vrot.lane.b32.xlu0 %v257, 64
    %v260 = vpop.permute.xlu0 %259
    %v262 = vadd.f32 %v252, %v260
    %v263 = vtanh.pop %v262
    %265 = vrot.lane.b32.xlu0 %v263, 64
    %v266 = vpop.permute.xlu0 %265
    %v268 = vmul.f32 %v250, %v266
    %v269 = vsel %vm167, %v268, 0.0
    %v271 = vperm.slane %v111, 0
    %v272 = vperm.slane %v111, 1
    %275 = vmatpush.msra.mxu0 %v109
    %276 = vmatpush.msra.mxu0 %v107
    %277 = vmatpush.msra.mxu0 %v105
    %278 = vmatpush.msra.mxu0 %v103
    %279 = vmatpush.msra.mxu0 %v101
    %280 = vmatpush.msra.mxu0 %v99
    %281 = vmatpush.msra.mxu0 %v97
    %282 = vmatpush.msra.mxu0 %v95
    %283 = vmatpush.msra.mxu0 %v93
    %284 = vmatpush.msra.mxu0 %v91
    %285 = vmatpush.msra.mxu0 %v89
    %286 = vmatpush.msra.mxu0 %v87
    %287 = vmatpush.msra.mxu0 %v85
    %288 = vmatpush.msra.mxu0 %v83
    %289 = vmatpush.msra.mxu0 %v81
    %290 = vmatpush.msra.mxu0 %v79
    %291 = vmatmul.f32.gmra.mxu0 %v269
    %v292 = vpop.f32.mrf.mxu0
    %v293 = vadd.f32 %v271, %v292
    %294 = vdwg.mxu0
    %295 = vmatpush.msra.mxu0 %v110
    %296 = vmatpush.msra.mxu0 %v108
    %297 = vmatpush.msra.mxu0 %v106
    %298 = vmatpush.msra.mxu0 %v104
    %299 = vmatpush.msra.mxu0 %v102
    %300 = vmatpush.msra.mxu0 %v100
    %301 = vmatpush.msra.mxu0 %v98
    %302 = vmatpush.msra.mxu0 %v96
    %303 = vmatpush.msra.mxu0 %v94
    %304 = vmatpush.msra.mxu0 %v92
    %305 = vmatpush.msra.mxu0 %v90
    %306 = vmatpush.msra.mxu0 %v88
    %307 = vmatpush.msra.mxu0 %v86
    %308 = vmatpush.msra.mxu0 %v84
    %309 = vmatpush.msra.mxu0 %v82
    %310 = vmatpush.msra.mxu0 %v80
    %311 = vmatmul.f32.gmra.mxu0 %v269
    %v312 = vpop.f32.mrf.mxu0
    %v313 = vadd.f32 %v272, %v312
    %314 = vdwg.mxu0
    %v315 = vxor.u32 %v293, 2147483648
    %v316 = vxor.u32 %v313, 2147483648
    %v317 = vmul.f32 %v315, 1.442695
    %v318 = vpow.pop %v317
    %v319 = vmul.f32 %v316, 1.442695
    %v320 = vpow.pop %v319
    %v321 = vadd.f32 %v318, 1.0
    %v322 = vadd.f32 %v320, 1.0
    %v323 = vrcp.pop %v321
    %v324 = vmul.f32 %v321, %v323
    %v325 = vsub.f32 1.0, %v324
    %v326 = vmul.f32 %v323, %v325
    %v327 = vadd.f32 %v323, %v326
    %vm328 = vweird.f32 %v321
    %vm329 = vweird.f32 %v323
    %vm330 = vmor %vm328, %vm329
    %v331 = vsel %vm330, %v323, %v327
    %v332 = vand.u32 2147483647, %v321
    %vm333 = vcmp.eq.f32.partialorder %v332, 8.507059e+37
    %v334 = vand.u32 %v321, 2147483648
    %v335 = vor.u32 1.1754944e-38, %v334
    %v336 = vsel %vm333, %v335, %v331
    %v337 = vmul.f32 1.0, %v336
    %v338 = vrcp.pop %v322
    %v339 = vmul.f32 %v322, %v338
    %v340 = vsub.f32 1.0, %v339
    %v341 = vmul.f32 %v338, %v340
    %v342 = vadd.f32 %v338, %v341
    %vm343 = vweird.f32 %v322
    %vm344 = vweird.f32 %v338
    %vm345 = vmor %vm343, %vm344
    %v346 = vsel %vm345, %v338, %v342
    %v347 = vand.u32 2147483647, %v322
    %vm348 = vcmp.eq.f32.partialorder %v347, 8.507059e+37
    %v349 = vand.u32 %v322, 2147483648
    %v350 = vor.u32 1.1754944e-38, %v349
    %v351 = vsel %vm348, %v350, %v346
    %v352 = vmul.f32 1.0, %v351
    %v353 = vtanh.pop %v313
    %v354 = vmul.f32 %v337, 0.0
    %356 = vrot.lane.b32.xlu0 %v353, 64
    %v357 = vpop.permute.xlu0 %356
    %v359 = vmul.f32 %v337, %v357
    %361 = vrot.lane.b32.xlu0 %v359, 64
    %v362 = vpop.permute.xlu0 %361
    %v364 = vadd.f32 %v354, %v362
    %v365 = vtanh.pop %v364
    %367 = vrot.lane.b32.xlu0 %v365, 64
    %v368 = vpop.permute.xlu0 %367
    %v370 = vmul.f32 %v352, %v368
    %v372 = vsel %vm167, %v268, 0
    %374 = vmatpush.msra.mxu0 0.0
    %375 = vmatpush.msra.mxu0 0.0
    %376 = vmatpush.msra.mxu0 0.0
    %377 = vmatpush.msra.mxu0 0.0
    %378 = vmatpush.msra.mxu0 0.0
    %379 = vmatpush.msra.mxu0 0.0
    %380 = vmatpush.msra.mxu0 0.0
    %381 = vmatpush.msra.mxu0 0.0
    %382 = vmatpush.msra.mxu0 %v77
    %383 = vmatpush.msra.mxu0 %v75
    %384 = vmatpush.msra.mxu0 %v73
    %385 = vmatpush.msra.mxu0 %v71
    %386 = vmatpush.msra.mxu0 %v69
    %387 = vmatpush.msra.mxu0 %v67
    %388 = vmatpush.msra.mxu0 %v65
    %389 = vmatpush.msra.mxu0 %v63
    %390 = vmatmul.f32.gmra.mxu0 %v372
    %v391 = vpop.f32.mrf.mxu0
    %v392 = vadd.f32 0.0, %v391
    %393 = vdwg.mxu0
    %394 = vmatpush.msra.mxu0 0.0
    %395 = vmatpush.msra.mxu0 0.0
    %396 = vmatpush.msra.mxu0 0.0
    %397 = vmatpush.msra.mxu0 0.0
    %398 = vmatpush.msra.mxu0 0.0
    %399 = vmatpush.msra.mxu0 0.0
    %400 = vmatpush.msra.mxu0 0.0
    %401 = vmatpush.msra.mxu0 0.0
    %402 = vmatpush.msra.mxu0 %v78
    %403 = vmatpush.msra.mxu0 %v76
    %404 = vmatpush.msra.mxu0 %v74
    %405 = vmatpush.msra.mxu0 %v72
    %406 = vmatpush.msra.mxu0 %v70
    %407 = vmatpush.msra.mxu0 %v68
    %408 = vmatpush.msra.mxu0 %v66
    %409 = vmatpush.msra.mxu0 %v64
    %410 = vmatmul.f32.gmra.mxu0 %v372
    %v411 = vpop.f32.mrf.mxu0
    %v412 = vadd.f32 0.0, %v411
    %413 = vdwg.mxu0
    %v416 = vrot.slane %v392, 7
    %v417 = vrot.slane %v412, 7
    %v420 = vadd.f32 %v145, %v416
    %v421 = vadd.f32 %v165, %v417
    %v422 = vxor.u32 %v420, 2147483648
    %v423 = vxor.u32 %v421, 2147483648
    %v424 = vmul.f32 %v422, 1.442695
    %v425 = vpow.pop %v424
    %v426 = vmul.f32 %v423, 1.442695
    %v427 = vpow.pop %v426
    %v428 = vadd.f32 %v425, 1.0
    %v429 = vadd.f32 %v427, 1.0
    %v430 = vrcp.pop %v428
    %v431 = vmul.f32 %v428, %v430
    %v432 = vsub.f32 1.0, %v431
    %v433 = vmul.f32 %v430, %v432
    %v434 = vadd.f32 %v430, %v433
    %vm435 = vweird.f32 %v428
    %vm436 = vweird.f32 %v430
    %vm437 = vmor %vm435, %vm436
    %v438 = vsel %vm437, %v430, %v434
    %v439 = vand.u32 2147483647, %v428
    %vm440 = vcmp.eq.f32.partialorder %v439, 8.507059e+37
    %v441 = vand.u32 %v428, 2147483648
    %v442 = vor.u32 1.1754944e-38, %v441
    %v443 = vsel %vm440, %v442, %v438
    %v444 = vmul.f32 1.0, %v443
    %v445 = vrcp.pop %v429
    %v446 = vmul.f32 %v429, %v445
    %v447 = vsub.f32 1.0, %v446
    %v448 = vmul.f32 %v445, %v447
    %v449 = vadd.f32 %v445, %v448
    %vm450 = vweird.f32 %v429
    %vm451 = vweird.f32 %v445
    %vm452 = vmor %vm450, %vm451
    %v453 = vsel %vm452, %v445, %v449
    %v454 = vand.u32 2147483647, %v429
    %vm455 = vcmp.eq.f32.partialorder %v454, 8.507059e+37
    %v456 = vand.u32 %v429, 2147483648
    %v457 = vor.u32 1.1754944e-38, %v456
    %v458 = vsel %vm455, %v457, %v453
    %v459 = vmul.f32 1.0, %v458
    %v460 = vtanh.pop %v421
    %v462 = vrot.slane %v262, 7
    %v464 = vmul.f32 %v444, %v462
    %466 = vrot.lane.b32.xlu0 %v460, 64
    %v467 = vpop.permute.xlu0 %466
    %v469 = vmul.f32 %v444, %v467
    %471 = vrot.lane.b32.xlu0 %v469, 64
    %v472 = vpop.permute.xlu0 %471
    %v474 = vadd.f32 %v464, %v472
    %v475 = vtanh.pop %v474
    %477 = vrot.lane.b32.xlu0 %v475, 64
    %v478 = vpop.permute.xlu0 %477
    %v480 = vmul.f32 %v459, %v478
    %v482 = vrot.slane %v370, 7
    %483 = vrot.lane.b32.xlu0 %v482, 64
    %v484 = vpop.permute.xlu0 %483
    %v486 = vsel %vm167, %v480, %v484
    %v488 = vrot.slane %v486, 1
    %490 = vmatpush.msra.mxu0 %v109
    %491 = vmatpush.msra.mxu0 %v107
    %492 = vmatpush.msra.mxu0 %v105
    %493 = vmatpush.msra.mxu0 %v103
    %494 = vmatpush.msra.mxu0 %v101
    %495 = vmatpush.msra.mxu0 %v99
    %496 = vmatpush.msra.mxu0 %v97
    %497 = vmatpush.msra.mxu0 %v95
    %498 = vmatpush.msra.mxu0 %v93
    %499 = vmatpush.msra.mxu0 %v91
    %500 = vmatpush.msra.mxu0 %v89
    %501 = vmatpush.msra.mxu0 %v87
    %502 = vmatpush.msra.mxu0 %v85
    %503 = vmatpush.msra.mxu0 %v83
    %504 = vmatpush.msra.mxu0 %v81
    %505 = vmatpush.msra.mxu0 %v79
    %506 = vmatmul.f32.gmra.mxu0 %v488
    %v507 = vpop.f32.mrf.mxu0
    %v508 = vadd.f32 %v271, %v507
    %509 = vdwg.mxu0
    %510 = vmatpush.msra.mxu0 %v110
    %511 = vmatpush.msra.mxu0 %v108
    %512 = vmatpush.msra.mxu0 %v106
    %513 = vmatpush.msra.mxu0 %v104
    %514 = vmatpush.msra.mxu0 %v102
    %515 = vmatpush.msra.mxu0 %v100
    %516 = vmatpush.msra.mxu0 %v98
    %517 = vmatpush.msra.mxu0 %v96
    %518 = vmatpush.msra.mxu0 %v94
    %519 = vmatpush.msra.mxu0 %v92
    %520 = vmatpush.msra.mxu0 %v90
    %521 = vmatpush.msra.mxu0 %v88
    %522 = vmatpush.msra.mxu0 %v86
    %523 = vmatpush.msra.mxu0 %v84
    %524 = vmatpush.msra.mxu0 %v82
    %525 = vmatpush.msra.mxu0 %v80
    %526 = vmatmul.f32.gmra.mxu0 %v488
    %v527 = vpop.f32.mrf.mxu0
    %v528 = vadd.f32 %v272, %v527
    %529 = vdwg.mxu0
    %v530 = vxor.u32 %v508, 2147483648
    %v531 = vxor.u32 %v528, 2147483648
    %v532 = vmul.f32 %v530, 1.442695
    %v533 = vpow.pop %v532
    %v534 = vmul.f32 %v531, 1.442695
    %v535 = vpow.pop %v534
    %v536 = vadd.f32 %v533, 1.0
    %v537 = vadd.f32 %v535, 1.0
    %v538 = vrcp.pop %v536
    %v539 = vmul.f32 %v536, %v538
    %v540 = vsub.f32 1.0, %v539
    %v541 = vmul.f32 %v538, %v540
    %v542 = vadd.f32 %v538, %v541
    %vm543 = vweird.f32 %v536
    %vm544 = vweird.f32 %v538
    %vm545 = vmor %vm543, %vm544
    %v546 = vsel %vm545, %v538, %v542
    %v547 = vand.u32 2147483647, %v536
    %vm548 = vcmp.eq.f32.partialorder %v547, 8.507059e+37
    %v549 = vand.u32 %v536, 2147483648
    %v550 = vor.u32 1.1754944e-38, %v549
    %v551 = vsel %vm548, %v550, %v546
    %v552 = vmul.f32 1.0, %v551
    %v553 = vrcp.pop %v537
    %v554 = vmul.f32 %v537, %v553
    %v555 = vsub.f32 1.0, %v554
    %v556 = vmul.f32 %v553, %v555
    %v557 = vadd.f32 %v553, %v556
    %vm558 = vweird.f32 %v537
    %vm559 = vweird.f32 %v553
    %vm560 = vmor %vm558, %vm559
    %v561 = vsel %vm560, %v553, %v557
    %v562 = vand.u32 2147483647, %v537
    %vm563 = vcmp.eq.f32.partialorder %v562, 8.507059e+37
    %v564 = vand.u32 %v537, 2147483648
    %v565 = vor.u32 1.1754944e-38, %v564
    %v566 = vsel %vm563, %v565, %v561
    %v567 = vmul.f32 1.0, %v566
    %v568 = vtanh.pop %v528
    %v569 = vmul.f32 %v552, %v364
    %571 = vrot.lane.b32.xlu0 %v568, 64
    %v572 = vpop.permute.xlu0 %571
    %v574 = vmul.f32 %v552, %v572
    %576 = vrot.lane.b32.xlu0 %v574, 64
    %v577 = vpop.permute.xlu0 %576
    %v579 = vadd.f32 %v569, %v577
    %v580 = vtanh.pop %v579
    %582 = vrot.lane.b32.xlu0 %v580, 64
    %v583 = vpop.permute.xlu0 %582
    %v585 = vmul.f32 %v567, %v583
    %v587 = vrot.slane %v480, 1
    %v588 = vsel %vm167, %v587, 0
    %590 = vmatpush.msra.mxu0 0.0
    %591 = vmatpush.msra.mxu0 0.0
    %592 = vmatpush.msra.mxu0 0.0
    %593 = vmatpush.msra.mxu0 0.0
    %594 = vmatpush.msra.mxu0 0.0
    %595 = vmatpush.msra.mxu0 0.0
    %596 = vmatpush.msra.mxu0 0.0
    %597 = vmatpush.msra.mxu0 0.0
    %598 = vmatpush.msra.mxu0 %v77
    %599 = vmatpush.msra.mxu0 %v75
    %600 = vmatpush.msra.mxu0 %v73
    %601 = vmatpush.msra.mxu0 %v71
    %602 = vmatpush.msra.mxu0 %v69
    %603 = vmatpush.msra.mxu0 %v67
    %604 = vmatpush.msra.mxu0 %v65
    %605 = vmatpush.msra.mxu0 %v63
    %606 = vmatmul.f32.gmra.mxu0 %v588
    %v607 = vpop.f32.mrf.mxu0
    %v608 = vadd.f32 0.0, %v607
    %609 = vdwg.mxu0
    %610 = vmatpush.msra.mxu0 0.0
    %611 = vmatpush.msra.mxu0 0.0
    %612 = vmatpush.msra.mxu0 0.0
    %613 = vmatpush.msra.mxu0 0.0
    %614 = vmatpush.msra.mxu0 0.0
    %615 = vmatpush.msra.mxu0 0.0
    %616 = vmatpush.msra.mxu0 0.0
    %617 = vmatpush.msra.mxu0 0.0
    %618 = vmatpush.msra.mxu0 %v78
    %619 = vmatpush.msra.mxu0 %v76
    %620 = vmatpush.msra.mxu0 %v74
    %621 = vmatpush.msra.mxu0 %v72
    %622 = vmatpush.msra.mxu0 %v70
    %623 = vmatpush.msra.mxu0 %v68
    %624 = vmatpush.msra.mxu0 %v66
    %625 = vmatpush.msra.mxu0 %v64
    %626 = vmatmul.f32.gmra.mxu0 %v588
    %v627 = vpop.f32.mrf.mxu0
    %v628 = vadd.f32 0.0, %v627
    %629 = vdwg.mxu0
    %v632 = vrot.slane %v608, 6
    %v633 = vrot.slane %v628, 6
    %v636 = vadd.f32 %v145, %v632
    %v637 = vadd.f32 %v165, %v633
    %v638 = vxor.u32 %v636, 2147483648
    %v639 = vxor.u32 %v637, 2147483648
    %v640 = vmul.f32 %v638, 1.442695
    %v641 = vpow.pop %v640
    %v642 = vmul.f32 %v639, 1.442695
    %v643 = vpow.pop %v642
    %v644 = vadd.f32 %v641, 1.0
    %v645 = vadd.f32 %v643, 1.0
    %v646 = vrcp.pop %v644
    %v647 = vmul.f32 %v644, %v646
    %v648 = vsub.f32 1.0, %v647
    %v649 = vmul.f32 %v646, %v648
    %v650 = vadd.f32 %v646, %v649
    %vm651 = vweird.f32 %v644
    %vm652 = vweird.f32 %v646
    %vm653 = vmor %vm651, %vm652
    %v654 = vsel %vm653, %v646, %v650
    %v655 = vand.u32 2147483647, %v644
    %vm656 = vcmp.eq.f32.partialorder %v655, 8.507059e+37
    %v657 = vand.u32 %v644, 2147483648
    %v658 = vor.u32 1.1754944e-38, %v657
    %v659 = vsel %vm656, %v658, %v654
    %v660 = vmul.f32 1.0, %v659
    %v661 = vrcp.pop %v645
    %v662 = vmul.f32 %v645, %v661
    %v663 = vsub.f32 1.0, %v662
    %v664 = vmul.f32 %v661, %v663
    %v665 = vadd.f32 %v661, %v664
    %vm666 = vweird.f32 %v645
    %vm667 = vweird.f32 %v661
    %vm668 = vmor %vm666, %vm667
    %v669 = vsel %vm668, %v661, %v665
    %v670 = vand.u32 2147483647, %v645
    %vm671 = vcmp.eq.f32.partialorder %v670, 8.507059e+37
    %v672 = vand.u32 %v645, 2147483648
    %v673 = vor.u32 1.1754944e-38, %v672
    %v674 = vsel %vm671, %v673, %v669
    %v675 = vmul.f32 1.0, %v674
    %v676 = vtanh.pop %v637
    %v678 = vrot.slane %v474, 7
    %v680 = vmul.f32 %v660, %v678
    %682 = vrot.lane.b32.xlu0 %v676, 64
    %v683 = vpop.permute.xlu0 %682
    %v685 = vmul.f32 %v660, %v683
    %687 = vrot.lane.b32.xlu0 %v685, 64
    %v688 = vpop.permute.xlu0 %687
    %v690 = vadd.f32 %v680, %v688
    %v691 = vtanh.pop %v690
    %693 = vrot.lane.b32.xlu0 %v691, 64
    %v694 = vpop.permute.xlu0 %693
    %v696 = vmul.f32 %v675, %v694
    %v698 = vrot.slane %v585, 6
    %699 = vrot.lane.b32.xlu0 %v698, 64
    %v700 = vpop.permute.xlu0 %699
    %v702 = vsel %vm167, %v696, %v700
    %v704 = vrot.slane %v702, 2
    %706 = vmatpush.msra.mxu0 %v109
    %707 = vmatpush.msra.mxu0 %v107
    %708 = vmatpush.msra.mxu0 %v105
    %709 = vmatpush.msra.mxu0 %v103
    %710 = vmatpush.msra.mxu0 %v101
    %711 = vmatpush.msra.mxu0 %v99
    %712 = vmatpush.msra.mxu0 %v97
    %713 = vmatpush.msra.mxu0 %v95
    %714 = vmatpush.msra.mxu0 %v93
    %715 = vmatpush.msra.mxu0 %v91
    %716 = vmatpush.msra.mxu0 %v89
    %717 = vmatpush.msra.mxu0 %v87
    %718 = vmatpush.msra.mxu0 %v85
    %719 = vmatpush.msra.mxu0 %v83
    %720 = vmatpush.msra.mxu0 %v81
    %721 = vmatpush.msra.mxu0 %v79
    %722 = vmatmul.f32.gmra.mxu0 %v704
    %v723 = vpop.f32.mrf.mxu0
    %v724 = vadd.f32 %v271, %v723
    %725 = vdwg.mxu0
    %726 = vmatpush.msra.mxu0 %v110
    %727 = vmatpush.msra.mxu0 %v108
    %728 = vmatpush.msra.mxu0 %v106
    %729 = vmatpush.msra.mxu0 %v104
    %730 = vmatpush.msra.mxu0 %v102
    %731 = vmatpush.msra.mxu0 %v100
    %732 = vmatpush.msra.mxu0 %v98
    %733 = vmatpush.msra.mxu0 %v96
    %734 = vmatpush.msra.mxu0 %v94
    %735 = vmatpush.msra.mxu0 %v92
    %736 = vmatpush.msra.mxu0 %v90
    %737 = vmatpush.msra.mxu0 %v88
    %738 = vmatpush.msra.mxu0 %v86
    %739 = vmatpush.msra.mxu0 %v84
    %740 = vmatpush.msra.mxu0 %v82
    %741 = vmatpush.msra.mxu0 %v80
    %742 = vmatmul.f32.gmra.mxu0 %v704
    %v743 = vpop.f32.mrf.mxu0
    %v744 = vadd.f32 %v272, %v743
    %745 = vdwg.mxu0
    %v746 = vxor.u32 %v724, 2147483648
    %v747 = vxor.u32 %v744, 2147483648
    %v748 = vmul.f32 %v746, 1.442695
    %v749 = vpow.pop %v748
    %v750 = vmul.f32 %v747, 1.442695
    %v751 = vpow.pop %v750
    %v752 = vadd.f32 %v749, 1.0
    %v753 = vadd.f32 %v751, 1.0
    %v754 = vrcp.pop %v752
    %v755 = vmul.f32 %v752, %v754
    %v756 = vsub.f32 1.0, %v755
    %v757 = vmul.f32 %v754, %v756
    %v758 = vadd.f32 %v754, %v757
    %vm759 = vweird.f32 %v752
    %vm760 = vweird.f32 %v754
    %vm761 = vmor %vm759, %vm760
    %v762 = vsel %vm761, %v754, %v758
    %v763 = vand.u32 2147483647, %v752
    %vm764 = vcmp.eq.f32.partialorder %v763, 8.507059e+37
    %v765 = vand.u32 %v752, 2147483648
    %v766 = vor.u32 1.1754944e-38, %v765
    %v767 = vsel %vm764, %v766, %v762
    %v768 = vmul.f32 1.0, %v767
    %v769 = vrcp.pop %v753
    %v770 = vmul.f32 %v753, %v769
    %v771 = vsub.f32 1.0, %v770
    %v772 = vmul.f32 %v769, %v771
    %v773 = vadd.f32 %v769, %v772
    %vm774 = vweird.f32 %v753
    %vm775 = vweird.f32 %v769
    %vm776 = vmor %vm774, %vm775
    %v777 = vsel %vm776, %v769, %v773
    %v778 = vand.u32 2147483647, %v753
    %vm779 = vcmp.eq.f32.partialorder %v778, 8.507059e+37
    %v780 = vand.u32 %v753, 2147483648
    %v781 = vor.u32 1.1754944e-38, %v780
    %v782 = vsel %vm779, %v781, %v777
    %v783 = vmul.f32 1.0, %v782
    %v784 = vtanh.pop %v744
    %v785 = vmul.f32 %v768, %v579
    %787 = vrot.lane.b32.xlu0 %v784, 64
    %v788 = vpop.permute.xlu0 %787
    %v790 = vmul.f32 %v768, %v788
    %792 = vrot.lane.b32.xlu0 %v790, 64
    %v793 = vpop.permute.xlu0 %792
    %v795 = vadd.f32 %v785, %v793
    %v796 = vtanh.pop %v795
    %798 = vrot.lane.b32.xlu0 %v796, 64
    %v799 = vpop.permute.xlu0 %798
    %v801 = vmul.f32 %v783, %v799
    %v803 = vrot.slane %v696, 2
    %v804 = vsel %vm167, %v803, 0
    %806 = vmatpush.msra.mxu0 0.0
    %807 = vmatpush.msra.mxu0 0.0
    %808 = vmatpush.msra.mxu0 0.0
    %809 = vmatpush.msra.mxu0 0.0
    %810 = vmatpush.msra.mxu0 0.0
    %811 = vmatpush.msra.mxu0 0.0
    %812 = vmatpush.msra.mxu0 0.0
    %813 = vmatpush.msra.mxu0 0.0
    %814 = vmatpush.msra.mxu0 %v77
    %815 = vmatpush.msra.mxu0 %v75
    %816 = vmatpush.msra.mxu0 %v73
    %817 = vmatpush.msra.mxu0 %v71
    %818 = vmatpush.msra.mxu0 %v69
    %819 = vmatpush.msra.mxu0 %v67
    %820 = vmatpush.msra.mxu0 %v65
    %821 = vmatpush.msra.mxu0 %v63
    %822 = vmatmul.f32.gmra.mxu0 %v804
    %v823 = vpop.f32.mrf.mxu0
    %v824 = vadd.f32 0.0, %v823
    %825 = vdwg.mxu0
    %826 = vmatpush.msra.mxu0 0.0
    %827 = vmatpush.msra.mxu0 0.0
    %828 = vmatpush.msra.mxu0 0.0
    %829 = vmatpush.msra.mxu0 0.0
    %830 = vmatpush.msra.mxu0 0.0
    %831 = vmatpush.msra.mxu0 0.0
    %832 = vmatpush.msra.mxu0 0.0
    %833 = vmatpush.msra.mxu0 0.0
    %834 = vmatpush.msra.mxu0 %v78
    %835 = vmatpush.msra.mxu0 %v76
    %836 = vmatpush.msra.mxu0 %v74
    %837 = vmatpush.msra.mxu0 %v72
    %838 = vmatpush.msra.mxu0 %v70
    %839 = vmatpush.msra.mxu0 %v68
    %840 = vmatpush.msra.mxu0 %v66
    %841 = vmatpush.msra.mxu0 %v64
    %842 = vmatmul.f32.gmra.mxu0 %v804
    %v843 = vpop.f32.mrf.mxu0
    %v844 = vadd.f32 0.0, %v843
    %845 = vdwg.mxu0
    %v848 = vrot.slane %v824, 5
    %v849 = vrot.slane %v844, 5
    %v852 = vadd.f32 %v145, %v848
    %v853 = vadd.f32 %v165, %v849
    %v854 = vxor.u32 %v852, 2147483648
    %v855 = vxor.u32 %v853, 2147483648
    %v856 = vmul.f32 %v854, 1.442695
    %v857 = vpow.pop %v856
    %v858 = vmul.f32 %v855, 1.442695
    %v859 = vpow.pop %v858
    %v860 = vadd.f32 %v857, 1.0
    %v861 = vadd.f32 %v859, 1.0
    %v862 = vrcp.pop %v860
    %v863 = vmul.f32 %v860, %v862
    %v864 = vsub.f32 1.0, %v863
    %v865 = vmul.f32 %v862, %v864
    %v866 = vadd.f32 %v862, %v865
    %vm867 = vweird.f32 %v860
    %vm868 = vweird.f32 %v862
    %vm869 = vmor %vm867, %vm868
    %v870 = vsel %vm869, %v862, %v866
    %v871 = vand.u32 2147483647, %v860
    %vm872 = vcmp.eq.f32.partialorder %v871, 8.507059e+37
    %v873 = vand.u32 %v860, 2147483648
    %v874 = vor.u32 1.1754944e-38, %v873
    %v875 = vsel %vm872, %v874, %v870
    %v876 = vmul.f32 1.0, %v875
    %v877 = vrcp.pop %v861
    %v878 = vmul.f32 %v861, %v877
    %v879 = vsub.f32 1.0, %v878
    %v880 = vmul.f32 %v877, %v879
    %v881 = vadd.f32 %v877, %v880
    %vm882 = vweird.f32 %v861
    %vm883 = vweird.f32 %v877
    %vm884 = vmor %vm882, %vm883
    %v885 = vsel %vm884, %v877, %v881
    %v886 = vand.u32 2147483647, %v861
    %vm887 = vcmp.eq.f32.partialorder %v886, 8.507059e+37
    %v888 = vand.u32 %v861, 2147483648
    %v889 = vor.u32 1.1754944e-38, %v888
    %v890 = vsel %vm887, %v889, %v885
    %v891 = vmul.f32 1.0, %v890
    %v892 = vtanh.pop %v853
    %v894 = vrot.slane %v690, 7
    %v896 = vmul.f32 %v876, %v894
    %898 = vrot.lane.b32.xlu0 %v892, 64
    %v899 = vpop.permute.xlu0 %898
    %v901 = vmul.f32 %v876, %v899
    %903 = vrot.lane.b32.xlu0 %v901, 64
    %v904 = vpop.permute.xlu0 %903
    %v906 = vadd.f32 %v896, %v904
    %v907 = vtanh.pop %v906
    %909 = vrot.lane.b32.xlu0 %v907, 64
    %v910 = vpop.permute.xlu0 %909
    %v912 = vmul.f32 %v891, %v910
    %v914 = vrot.slane %v801, 5
    %915 = vrot.lane.b32.xlu0 %v914, 64
    %v916 = vpop.permute.xlu0 %915
    %v918 = vsel %vm167, %v912, %v916
    %v920 = vrot.slane %v918, 3
    %922 = vmatpush.msra.mxu0 %v109
    %923 = vmatpush.msra.mxu0 %v107
    %924 = vmatpush.msra.mxu0 %v105
    %925 = vmatpush.msra.mxu0 %v103
    %926 = vmatpush.msra.mxu0 %v101
    %927 = vmatpush.msra.mxu0 %v99
    %928 = vmatpush.msra.mxu0 %v97
    %929 = vmatpush.msra.mxu0 %v95
    %930 = vmatpush.msra.mxu0 %v93
    %931 = vmatpush.msra.mxu0 %v91
    %932 = vmatpush.msra.mxu0 %v89
    %933 = vmatpush.msra.mxu0 %v87
    %934 = vmatpush.msra.mxu0 %v85
    %935 = vmatpush.msra.mxu0 %v83
    %936 = vmatpush.msra.mxu0 %v81
    %937 = vmatpush.msra.mxu0 %v79
    %938 = vmatmul.f32.gmra.mxu0 %v920
    %v939 = vpop.f32.mrf.mxu0
    %v940 = vadd.f32 %v271, %v939
    %941 = vdwg.mxu0
    %942 = vmatpush.msra.mxu0 %v110
    %943 = vmatpush.msra.mxu0 %v108
    %944 = vmatpush.msra.mxu0 %v106
    %945 = vmatpush.msra.mxu0 %v104
    %946 = vmatpush.msra.mxu0 %v102
    %947 = vmatpush.msra.mxu0 %v100
    %948 = vmatpush.msra.mxu0 %v98
    %949 = vmatpush.msra.mxu0 %v96
    %950 = vmatpush.msra.mxu0 %v94
    %951 = vmatpush.msra.mxu0 %v92
    %952 = vmatpush.msra.mxu0 %v90
    %953 = vmatpush.msra.mxu0 %v88
    %954 = vmatpush.msra.mxu0 %v86
    %955 = vmatpush.msra.mxu0 %v84
    %956 = vmatpush.msra.mxu0 %v82
    %957 = vmatpush.msra.mxu0 %v80
    %958 = vmatmul.f32.gmra.mxu0 %v920
    %v959 = vpop.f32.mrf.mxu0
    %v960 = vadd.f32 %v272, %v959
    %961 = vdwg.mxu0
    %v962 = vxor.u32 %v940, 2147483648
    %v963 = vxor.u32 %v960, 2147483648
    %v964 = vmul.f32 %v962, 1.442695
    %v965 = vpow.pop %v964
    %v966 = vmul.f32 %v963, 1.442695
    %v967 = vpow.pop %v966
    %v968 = vadd.f32 %v965, 1.0
    %v969 = vadd.f32 %v967, 1.0
    %v970 = vrcp.pop %v968
    %v971 = vmul.f32 %v968, %v970
    %v972 = vsub.f32 1.0, %v971
    %v973 = vmul.f32 %v970, %v972
    %v974 = vadd.f32 %v970, %v973
    %vm975 = vweird.f32 %v968
    %vm976 = vweird.f32 %v970
    %vm977 = vmor %vm975, %vm976
    %v978 = vsel %vm977, %v970, %v974
    %v979 = vand.u32 2147483647, %v968
    %vm980 = vcmp.eq.f32.partialorder %v979, 8.507059e+37
    %v981 = vand.u32 %v968, 2147483648
    %v982 = vor.u32 1.1754944e-38, %v981
    %v983 = vsel %vm980, %v982, %v978
    %v984 = vmul.f32 1.0, %v983
    %v985 = vrcp.pop %v969
    %v986 = vmul.f32 %v969, %v985
    %v987 = vsub.f32 1.0, %v986
    %v988 = vmul.f32 %v985, %v987
    %v989 = vadd.f32 %v985, %v988
    %vm990 = vweird.f32 %v969
    %vm991 = vweird.f32 %v985
    %vm992 = vmor %vm990, %vm991
    %v993 = vsel %vm992, %v985, %v989
    %v994 = vand.u32 2147483647, %v969
    %vm995 = vcmp.eq.f32.partialorder %v994, 8.507059e+37
    %v996 = vand.u32 %v969, 2147483648
    %v997 = vor.u32 1.1754944e-38, %v996
    %v998 = vsel %vm995, %v997, %v993
    %v999 = vmul.f32 1.0, %v998
    %v1000 = vtanh.pop %v960
    %v1001 = vmul.f32 %v984, %v795
    %1003 = vrot.lane.b32.xlu0 %v1000, 64
    %v1004 = vpop.permute.xlu0 %1003
    %v1006 = vmul.f32 %v984, %v1004
    %1008 = vrot.lane.b32.xlu0 %v1006, 64
    %v1009 = vpop.permute.xlu0 %1008
    %v1011 = vadd.f32 %v1001, %v1009
    %v1012 = vtanh.pop %v1011
    %1014 = vrot.lane.b32.xlu0 %v1012, 64
    %v1015 = vpop.permute.xlu0 %1014
    %v1017 = vmul.f32 %v999, %v1015
    %v1019 = vrot.slane %v912, 3
    %v1020 = vsel %vm167, %v1019, 0
    %1022 = vmatpush.msra.mxu0 0.0
    %1023 = vmatpush.msra.mxu0 0.0
    %1024 = vmatpush.msra.mxu0 0.0
    %1025 = vmatpush.msra.mxu0 0.0
    %1026 = vmatpush.msra.mxu0 0.0
    %1027 = vmatpush.msra.mxu0 0.0
    %1028 = vmatpush.msra.mxu0 0.0
    %1029 = vmatpush.msra.mxu0 0.0
    %1030 = vmatpush.msra.mxu0 %v77
    %1031 = vmatpush.msra.mxu0 %v75
    %1032 = vmatpush.msra.mxu0 %v73
    %1033 = vmatpush.msra.mxu0 %v71
    %1034 = vmatpush.msra.mxu0 %v69
    %1035 = vmatpush.msra.mxu0 %v67
    %1036 = vmatpush.msra.mxu0 %v65
    %1037 = vmatpush.msra.mxu0 %v63
    %1038 = vmatmul.f32.gmra.mxu0 %v1020
    %v1039 = vpop.f32.mrf.mxu0
    %v1040 = vadd.f32 0.0, %v1039
    %1041 = vdwg.mxu0
    %1042 = vmatpush.msra.mxu0 0.0
    %1043 = vmatpush.msra.mxu0 0.0
    %1044 = vmatpush.msra.mxu0 0.0
    %1045 = vmatpush.msra.mxu0 0.0
    %1046 = vmatpush.msra.mxu0 0.0
    %1047 = vmatpush.msra.mxu0 0.0
    %1048 = vmatpush.msra.mxu0 0.0
    %1049 = vmatpush.msra.mxu0 0.0
    %1050 = vmatpush.msra.mxu0 %v78
    %1051 = vmatpush.msra.mxu0 %v76
    %1052 = vmatpush.msra.mxu0 %v74
    %1053 = vmatpush.msra.mxu0 %v72
    %1054 = vmatpush.msra.mxu0 %v70
    %1055 = vmatpush.msra.mxu0 %v68
    %1056 = vmatpush.msra.mxu0 %v66
    %1057 = vmatpush.msra.mxu0 %v64
    %1058 = vmatmul.f32.gmra.mxu0 %v1020
    %v1059 = vpop.f32.mrf.mxu0
    %v1060 = vadd.f32 0.0, %v1059
    %1061 = vdwg.mxu0
    %v1064 = vrot.slane %v1040, 4
    %v1065 = vrot.slane %v1060, 4
    %v1068 = vadd.f32 %v145, %v1064
    %v1069 = vadd.f32 %v165, %v1065
    %v1070 = vxor.u32 %v1068, 2147483648
    %v1071 = vxor.u32 %v1069, 2147483648
    %v1072 = vmul.f32 %v1070, 1.442695
    %v1073 = vpow.pop %v1072
    %v1074 = vmul.f32 %v1071, 1.442695
    %v1075 = vpow.pop %v1074
    %v1076 = vadd.f32 %v1073, 1.0
    %v1077 = vadd.f32 %v1075, 1.0
    %v1078 = vrcp.pop %v1076
    %v1079 = vmul.f32 %v1076, %v1078
    %v1080 = vsub.f32 1.0, %v1079
    %v1081 = vmul.f32 %v1078, %v1080
    %v1082 = vadd.f32 %v1078, %v1081
    %vm1083 = vweird.f32 %v1076
    %vm1084 = vweird.f32 %v1078
    %vm1085 = vmor %vm1083, %vm1084
    %v1086 = vsel %vm1085, %v1078, %v1082
    %v1087 = vand.u32 2147483647, %v1076
    %vm1088 = vcmp.eq.f32.partialorder %v1087, 8.507059e+37
    %v1089 = vand.u32 %v1076, 2147483648
    %v1090 = vor.u32 1.1754944e-38, %v1089
    %v1091 = vsel %vm1088, %v1090, %v1086
    %v1092 = vmul.f32 1.0, %v1091
    %v1093 = vrcp.pop %v1077
    %v1094 = vmul.f32 %v1077, %v1093
    %v1095 = vsub.f32 1.0, %v1094
    %v1096 = vmul.f32 %v1093, %v1095
    %v1097 = vadd.f32 %v1093, %v1096
    %vm1098 = vweird.f32 %v1077
    %vm1099 = vweird.f32 %v1093
    %vm1100 = vmor %vm1098, %vm1099
    %v1101 = vsel %vm1100, %v1093, %v1097
    %v1102 = vand.u32 2147483647, %v1077
    %vm1103 = vcmp.eq.f32.partialorder %v1102, 8.507059e+37
    %v1104 = vand.u32 %v1077, 2147483648
    %v1105 = vor.u32 1.1754944e-38, %v1104
    %v1106 = vsel %vm1103, %v1105, %v1101
    %v1107 = vmul.f32 1.0, %v1106
    %v1108 = vtanh.pop %v1069
    %v1110 = vrot.slane %v906, 7
    %v1112 = vmul.f32 %v1092, %v1110
    %1114 = vrot.lane.b32.xlu0 %v1108, 64
    %v1115 = vpop.permute.xlu0 %1114
    %v1117 = vmul.f32 %v1092, %v1115
    %1119 = vrot.lane.b32.xlu0 %v1117, 64
    %v1120 = vpop.permute.xlu0 %1119
    %v1122 = vadd.f32 %v1112, %v1120
    %v1123 = vtanh.pop %v1122
    %1125 = vrot.lane.b32.xlu0 %v1123, 64
    %v1126 = vpop.permute.xlu0 %1125
    %v1128 = vmul.f32 %v1107, %v1126
    %v1130 = vrot.slane %v1017, 4
    %1131 = vrot.lane.b32.xlu0 %v1130, 64
    %v1132 = vpop.permute.xlu0 %1131
    %v1134 = vsel %vm167, %v1128, %v1132
    %v1136 = vrot.slane %v1134, 4
    %1138 = vmatpush.msra.mxu0 %v109
    %1139 = vmatpush.msra.mxu0 %v107
    %1140 = vmatpush.msra.mxu0 %v105
    %1141 = vmatpush.msra.mxu0 %v103
    %1142 = vmatpush.msra.mxu0 %v101
    %1143 = vmatpush.msra.mxu0 %v99
    %1144 = vmatpush.msra.mxu0 %v97
    %1145 = vmatpush.msra.mxu0 %v95
    %1146 = vmatpush.msra.mxu0 %v93
    %1147 = vmatpush.msra.mxu0 %v91
    %1148 = vmatpush.msra.mxu0 %v89
    %1149 = vmatpush.msra.mxu0 %v87
    %1150 = vmatpush.msra.mxu0 %v85
    %1151 = vmatpush.msra.mxu0 %v83
    %1152 = vmatpush.msra.mxu0 %v81
    %1153 = vmatpush.msra.mxu0 %v79
    %1154 = vmatmul.f32.gmra.mxu0 %v1136
    %v1155 = vpop.f32.mrf.mxu0
    %v1156 = vadd.f32 %v271, %v1155
    %1157 = vdwg.mxu0
    %1158 = vmatpush.msra.mxu0 %v110
    %1159 = vmatpush.msra.mxu0 %v108
    %1160 = vmatpush.msra.mxu0 %v106
    %1161 = vmatpush.msra.mxu0 %v104
    %1162 = vmatpush.msra.mxu0 %v102
    %1163 = vmatpush.msra.mxu0 %v100
    %1164 = vmatpush.msra.mxu0 %v98
    %1165 = vmatpush.msra.mxu0 %v96
    %1166 = vmatpush.msra.mxu0 %v94
    %1167 = vmatpush.msra.mxu0 %v92
    %1168 = vmatpush.msra.mxu0 %v90
    %1169 = vmatpush.msra.mxu0 %v88
    %1170 = vmatpush.msra.mxu0 %v86
    %1171 = vmatpush.msra.mxu0 %v84
    %1172 = vmatpush.msra.mxu0 %v82
    %1173 = vmatpush.msra.mxu0 %v80
    %1174 = vmatmul.f32.gmra.mxu0 %v1136
    %v1175 = vpop.f32.mrf.mxu0
    %v1176 = vadd.f32 %v272, %v1175
    %1177 = vdwg.mxu0
    %v1178 = vxor.u32 %v1156, 2147483648
    %v1179 = vxor.u32 %v1176, 2147483648
    %v1180 = vmul.f32 %v1178, 1.442695
    %v1181 = vpow.pop %v1180
    %v1182 = vmul.f32 %v1179, 1.442695
    %v1183 = vpow.pop %v1182
    %v1184 = vadd.f32 %v1181, 1.0
    %v1185 = vadd.f32 %v1183, 1.0
    %v1186 = vrcp.pop %v1184
    %v1187 = vmul.f32 %v1184, %v1186
    %v1188 = vsub.f32 1.0, %v1187
    %v1189 = vmul.f32 %v1186, %v1188
    %v1190 = vadd.f32 %v1186, %v1189
    %vm1191 = vweird.f32 %v1184
    %vm1192 = vweird.f32 %v1186
    %vm1193 = vmor %vm1191, %vm1192
    %v1194 = vsel %vm1193, %v1186, %v1190
    %v1195 = vand.u32 2147483647, %v1184
    %vm1196 = vcmp.eq.f32.partialorder %v1195, 8.507059e+37
    %v1197 = vand.u32 %v1184, 2147483648
    %v1198 = vor.u32 1.1754944e-38, %v1197
    %v1199 = vsel %vm1196, %v1198, %v1194
    %v1200 = vmul.f32 1.0, %v1199
    %v1201 = vrcp.pop %v1185
    %v1202 = vmul.f32 %v1185, %v1201
    %v1203 = vsub.f32 1.0, %v1202
    %v1204 = vmul.f32 %v1201, %v1203
    %v1205 = vadd.f32 %v1201, %v1204
    %vm1206 = vweird.f32 %v1185
    %vm1207 = vweird.f32 %v1201
    %vm1208 = vmor %vm1206, %vm1207
    %v1209 = vsel %vm1208, %v1201, %v1205
    %v1210 = vand.u32 2147483647, %v1185
    %vm1211 = vcmp.eq.f32.partialorder %v1210, 8.507059e+37
    %v1212 = vand.u32 %v1185, 2147483648
    %v1213 = vor.u32 1.1754944e-38, %v1212
    %v1214 = vsel %vm1211, %v1213, %v1209
    %v1215 = vmul.f32 1.0, %v1214
    %v1216 = vtanh.pop %v1176
    %v1217 = vmul.f32 %v1200, %v1011
    %1219 = vrot.lane.b32.xlu0 %v1216, 64
    %v1220 = vpop.permute.xlu0 %1219
    %v1222 = vmul.f32 %v1200, %v1220
    %1224 = vrot.lane.b32.xlu0 %v1222, 64
    %v1225 = vpop.permute.xlu0 %1224
    %v1227 = vadd.f32 %v1217, %v1225
    %v1228 = vtanh.pop %v1227
    %1230 = vrot.lane.b32.xlu0 %v1228, 64
    %v1231 = vpop.permute.xlu0 %1230
    %v1233 = vmul.f32 %v1215, %v1231
    %v1235 = vrot.slane %v1128, 4
    %v1236 = vsel %vm167, %v1235, 0
    %1238 = vmatpush.msra.mxu0 0.0
    %1239 = vmatpush.msra.mxu0 0.0
    %1240 = vmatpush.msra.mxu0 0.0
    %1241 = vmatpush.msra.mxu0 0.0
    %1242 = vmatpush.msra.mxu0 0.0
    %1243 = vmatpush.msra.mxu0 0.0
    %1244 = vmatpush.msra.mxu0 0.0
    %1245 = vmatpush.msra.mxu0 0.0
    %1246 = vmatpush.msra.mxu0 %v77
    %1247 = vmatpush.msra.mxu0 %v75
    %1248 = vmatpush.msra.mxu0 %v73
    %1249 = vmatpush.msra.mxu0 %v71
    %1250 = vmatpush.msra.mxu0 %v69
    %1251 = vmatpush.msra.mxu0 %v67
    %1252 = vmatpush.msra.mxu0 %v65
    %1253 = vmatpush.msra.mxu0 %v63
    %1254 = vmatmul.f32.gmra.mxu0 %v1236
    %v1255 = vpop.f32.mrf.mxu0
    %v1256 = vadd.f32 0.0, %v1255
    %1257 = vdwg.mxu0
    %1258 = vmatpush.msra.mxu0 0.0
    %1259 = vmatpush.msra.mxu0 0.0
    %1260 = vmatpush.msra.mxu0 0.0
    %1261 = vmatpush.msra.mxu0 0.0
    %1262 = vmatpush.msra.mxu0 0.0
    %1263 = vmatpush.msra.mxu0 0.0
    %1264 = vmatpush.msra.mxu0 0.0
    %1265 = vmatpush.msra.mxu0 0.0
    %1266 = vmatpush.msra.mxu0 %v78
    %1267 = vmatpush.msra.mxu0 %v76
    %1268 = vmatpush.msra.mxu0 %v74
    %1269 = vmatpush.msra.mxu0 %v72
    %1270 = vmatpush.msra.mxu0 %v70
    %1271 = vmatpush.msra.mxu0 %v68
    %1272 = vmatpush.msra.mxu0 %v66
    %1273 = vmatpush.msra.mxu0 %v64
    %1274 = vmatmul.f32.gmra.mxu0 %v1236
    %v1275 = vpop.f32.mrf.mxu0
    %v1276 = vadd.f32 0.0, %v1275
    %1277 = vdwg.mxu0
    %v1280 = vrot.slane %v1256, 3
    %v1281 = vrot.slane %v1276, 3
    %v1284 = vadd.f32 %v145, %v1280
    %v1285 = vadd.f32 %v165, %v1281
    %v1286 = vxor.u32 %v1284, 2147483648
    %v1287 = vxor.u32 %v1285, 2147483648
    %v1288 = vmul.f32 %v1286, 1.442695
    %v1289 = vpow.pop %v1288
    %v1290 = vmul.f32 %v1287, 1.442695
    %v1291 = vpow.pop %v1290
    %v1292 = vadd.f32 %v1289, 1.0
    %v1293 = vadd.f32 %v1291, 1.0
    %v1294 = vrcp.pop %v1292
    %v1295 = vmul.f32 %v1292, %v1294
    %v1296 = vsub.f32 1.0, %v1295
    %v1297 = vmul.f32 %v1294, %v1296
    %v1298 = vadd.f32 %v1294, %v1297
    %vm1299 = vweird.f32 %v1292
    %vm1300 = vweird.f32 %v1294
    %vm1301 = vmor %vm1299, %vm1300
    %v1302 = vsel %vm1301, %v1294, %v1298
    %v1303 = vand.u32 2147483647, %v1292
    %vm1304 = vcmp.eq.f32.partialorder %v1303, 8.507059e+37
    %v1305 = vand.u32 %v1292, 2147483648
    %v1306 = vor.u32 1.1754944e-38, %v1305
    %v1307 = vsel %vm1304, %v1306, %v1302
    %v1308 = vmul.f32 1.0, %v1307
    %v1309 = vrcp.pop %v1293
    %v1310 = vmul.f32 %v1293, %v1309
    %v1311 = vsub.f32 1.0, %v1310
    %v1312 = vmul.f32 %v1309, %v1311
    %v1313 = vadd.f32 %v1309, %v1312
    %vm1314 = vweird.f32 %v1293
    %vm1315 = vweird.f32 %v1309
    %vm1316 = vmor %vm1314, %vm1315
    %v1317 = vsel %vm1316, %v1309, %v1313
    %v1318 = vand.u32 2147483647, %v1293
    %vm1319 = vcmp.eq.f32.partialorder %v1318, 8.507059e+37
    %v1320 = vand.u32 %v1293, 2147483648
    %v1321 = vor.u32 1.1754944e-38, %v1320
    %v1322 = vsel %vm1319, %v1321, %v1317
    %v1323 = vmul.f32 1.0, %v1322
    %v1324 = vtanh.pop %v1285
    %v1326 = vrot.slane %v1122, 7
    %v1328 = vmul.f32 %v1308, %v1326
    %1330 = vrot.lane.b32.xlu0 %v1324, 64
    %v1331 = vpop.permute.xlu0 %1330
    %v1333 = vmul.f32 %v1308, %v1331
    %1335 = vrot.lane.b32.xlu0 %v1333, 64
    %v1336 = vpop.permute.xlu0 %1335
    %v1338 = vadd.f32 %v1328, %v1336
    %v1339 = vtanh.pop %v1338
    %1341 = vrot.lane.b32.xlu0 %v1339, 64
    %v1342 = vpop.permute.xlu0 %1341
    %v1344 = vmul.f32 %v1323, %v1342
    %v1346 = vrot.slane %v1233, 3
    %1347 = vrot.lane.b32.xlu0 %v1346, 64
    %v1348 = vpop.permute.xlu0 %1347
    %v1350 = vsel %vm167, %v1344, %v1348
    %v1352 = vrot.slane %v1350, 5
    %1354 = vmatpush.msra.mxu0 %v109
    %1355 = vmatpush.msra.mxu0 %v107
    %1356 = vmatpush.msra.mxu0 %v105
    %1357 = vmatpush.msra.mxu0 %v103
    %1358 = vmatpush.msra.mxu0 %v101
    %1359 = vmatpush.msra.mxu0 %v99
    %1360 = vmatpush.msra.mxu0 %v97
    %1361 = vmatpush.msra.mxu0 %v95
    %1362 = vmatpush.msra.mxu0 %v93
    %1363 = vmatpush.msra.mxu0 %v91
    %1364 = vmatpush.msra.mxu0 %v89
    %1365 = vmatpush.msra.mxu0 %v87
    %1366 = vmatpush.msra.mxu0 %v85
    %1367 = vmatpush.msra.mxu0 %v83
    %1368 = vmatpush.msra.mxu0 %v81
    %1369 = vmatpush.msra.mxu0 %v79
    %1370 = vmatmul.f32.gmra.mxu0 %v1352
    %v1371 = vpop.f32.mrf.mxu0
    %v1372 = vadd.f32 %v271, %v1371
    %1373 = vdwg.mxu0
    %1374 = vmatpush.msra.mxu0 %v110
    %1375 = vmatpush.msra.mxu0 %v108
    %1376 = vmatpush.msra.mxu0 %v106
    %1377 = vmatpush.msra.mxu0 %v104
    %1378 = vmatpush.msra.mxu0 %v102
    %1379 = vmatpush.msra.mxu0 %v100
    %1380 = vmatpush.msra.mxu0 %v98
    %1381 = vmatpush.msra.mxu0 %v96
    %1382 = vmatpush.msra.mxu0 %v94
    %1383 = vmatpush.msra.mxu0 %v92
    %1384 = vmatpush.msra.mxu0 %v90
    %1385 = vmatpush.msra.mxu0 %v88
    %1386 = vmatpush.msra.mxu0 %v86
    %1387 = vmatpush.msra.mxu0 %v84
    %1388 = vmatpush.msra.mxu0 %v82
    %1389 = vmatpush.msra.mxu0 %v80
    %1390 = vmatmul.f32.gmra.mxu0 %v1352
    %v1391 = vpop.f32.mrf.mxu0
    %v1392 = vadd.f32 %v272, %v1391
    %1393 = vdwg.mxu0
    %v1394 = vxor.u32 %v1372, 2147483648
    %v1395 = vxor.u32 %v1392, 2147483648
    %v1396 = vmul.f32 %v1394, 1.442695
    %v1397 = vpow.pop %v1396
    %v1398 = vmul.f32 %v1395, 1.442695
    %v1399 = vpow.pop %v1398
    %v1400 = vadd.f32 %v1397, 1.0
    %v1401 = vadd.f32 %v1399, 1.0
    %v1402 = vrcp.pop %v1400
    %v1403 = vmul.f32 %v1400, %v1402
    %v1404 = vsub.f32 1.0, %v1403
    %v1405 = vmul.f32 %v1402, %v1404
    %v1406 = vadd.f32 %v1402, %v1405
    %vm1407 = vweird.f32 %v1400
    %vm1408 = vweird.f32 %v1402
    %vm1409 = vmor %vm1407, %vm1408
    %v1410 = vsel %vm1409, %v1402, %v1406
    %v1411 = vand.u32 2147483647, %v1400
    %vm1412 = vcmp.eq.f32.partialorder %v1411, 8.507059e+37
    %v1413 = vand.u32 %v1400, 2147483648
    %v1414 = vor.u32 1.1754944e-38, %v1413
    %v1415 = vsel %vm1412, %v1414, %v1410
    %v1416 = vmul.f32 1.0, %v1415
    %v1417 = vrcp.pop %v1401
    %v1418 = vmul.f32 %v1401, %v1417
    %v1419 = vsub.f32 1.0, %v1418
    %v1420 = vmul.f32 %v1417, %v1419
    %v1421 = vadd.f32 %v1417, %v1420
    %vm1422 = vweird.f32 %v1401
    %vm1423 = vweird.f32 %v1417
    %vm1424 = vmor %vm1422, %vm1423
    %v1425 = vsel %vm1424, %v1417, %v1421
    %v1426 = vand.u32 2147483647, %v1401
    %vm1427 = vcmp.eq.f32.partialorder %v1426, 8.507059e+37
    %v1428 = vand.u32 %v1401, 2147483648
    %v1429 = vor.u32 1.1754944e-38, %v1428
    %v1430 = vsel %vm1427, %v1429, %v1425
    %v1431 = vmul.f32 1.0, %v1430
    %v1432 = vtanh.pop %v1392
    %v1433 = vmul.f32 %v1416, %v1227
    %1435 = vrot.lane.b32.xlu0 %v1432, 64
    %v1436 = vpop.permute.xlu0 %1435
    %v1438 = vmul.f32 %v1416, %v1436
    %1440 = vrot.lane.b32.xlu0 %v1438, 64
    %v1441 = vpop.permute.xlu0 %1440
    %v1443 = vadd.f32 %v1433, %v1441
    %v1444 = vtanh.pop %v1443
    %1446 = vrot.lane.b32.xlu0 %v1444, 64
    %v1447 = vpop.permute.xlu0 %1446
    %v1449 = vmul.f32 %v1431, %v1447
    %v1451 = vrot.slane %v1344, 5
    %v1452 = vsel %vm167, %v1451, 0
    %1454 = vmatpush.msra.mxu0 0.0
    %1455 = vmatpush.msra.mxu0 0.0
    %1456 = vmatpush.msra.mxu0 0.0
    %1457 = vmatpush.msra.mxu0 0.0
    %1458 = vmatpush.msra.mxu0 0.0
    %1459 = vmatpush.msra.mxu0 0.0
    %1460 = vmatpush.msra.mxu0 0.0
    %1461 = vmatpush.msra.mxu0 0.0
    %1462 = vmatpush.msra.mxu0 %v77
    %1463 = vmatpush.msra.mxu0 %v75
    %1464 = vmatpush.msra.mxu0 %v73
    %1465 = vmatpush.msra.mxu0 %v71
    %1466 = vmatpush.msra.mxu0 %v69
    %1467 = vmatpush.msra.mxu0 %v67
    %1468 = vmatpush.msra.mxu0 %v65
    %1469 = vmatpush.msra.mxu0 %v63
    %1470 = vmatmul.f32.gmra.mxu0 %v1452
    %v1471 = vpop.f32.mrf.mxu0
    %v1472 = vadd.f32 0.0, %v1471
    %1473 = vdwg.mxu0
    %1474 = vmatpush.msra.mxu0 0.0
    %1475 = vmatpush.msra.mxu0 0.0
    %1476 = vmatpush.msra.mxu0 0.0
    %1477 = vmatpush.msra.mxu0 0.0
    %1478 = vmatpush.msra.mxu0 0.0
    %1479 = vmatpush.msra.mxu0 0.0
    %1480 = vmatpush.msra.mxu0 0.0
    %1481 = vmatpush.msra.mxu0 0.0
    %1482 = vmatpush.msra.mxu0 %v78
    %1483 = vmatpush.msra.mxu0 %v76
    %1484 = vmatpush.msra.mxu0 %v74
    %1485 = vmatpush.msra.mxu0 %v72
    %1486 = vmatpush.msra.mxu0 %v70
    %1487 = vmatpush.msra.mxu0 %v68
    %1488 = vmatpush.msra.mxu0 %v66
    %1489 = vmatpush.msra.mxu0 %v64
    %1490 = vmatmul.f32.gmra.mxu0 %v1452
    %v1491 = vpop.f32.mrf.mxu0
    %v1492 = vadd.f32 0.0, %v1491
    %1493 = vdwg.mxu0
    %v1496 = vrot.slane %v1472, 2
    %v1497 = vrot.slane %v1492, 2
    %v1500 = vadd.f32 %v145, %v1496
    %v1501 = vadd.f32 %v165, %v1497
    %v1502 = vxor.u32 %v1500, 2147483648
    %v1503 = vxor.u32 %v1501, 2147483648
    %v1504 = vmul.f32 %v1502, 1.442695
    %v1505 = vpow.pop %v1504
    %v1506 = vmul.f32 %v1503, 1.442695
    %v1507 = vpow.pop %v1506
    %v1508 = vadd.f32 %v1505, 1.0
    %v1509 = vadd.f32 %v1507, 1.0
    %v1510 = vrcp.pop %v1508
    %v1511 = vmul.f32 %v1508, %v1510
    %v1512 = vsub.f32 1.0, %v1511
    %v1513 = vmul.f32 %v1510, %v1512
    %v1514 = vadd.f32 %v1510, %v1513
    %vm1515 = vweird.f32 %v1508
    %vm1516 = vweird.f32 %v1510
    %vm1517 = vmor %vm1515, %vm1516
    %v1518 = vsel %vm1517, %v1510, %v1514
    %v1519 = vand.u32 2147483647, %v1508
    %vm1520 = vcmp.eq.f32.partialorder %v1519, 8.507059e+37
    %v1521 = vand.u32 %v1508, 2147483648
    %v1522 = vor.u32 1.1754944e-38, %v1521
    %v1523 = vsel %vm1520, %v1522, %v1518
    %v1524 = vmul.f32 1.0, %v1523
    %v1525 = vrcp.pop %v1509
    %v1526 = vmul.f32 %v1509, %v1525
    %v1527 = vsub.f32 1.0, %v1526
    %v1528 = vmul.f32 %v1525, %v1527
    %v1529 = vadd.f32 %v1525, %v1528
    %vm1530 = vweird.f32 %v1509
    %vm1531 = vweird.f32 %v1525
    %vm1532 = vmor %vm1530, %vm1531
    %v1533 = vsel %vm1532, %v1525, %v1529
    %v1534 = vand.u32 2147483647, %v1509
    %vm1535 = vcmp.eq.f32.partialorder %v1534, 8.507059e+37
    %v1536 = vand.u32 %v1509, 2147483648
    %v1537 = vor.u32 1.1754944e-38, %v1536
    %v1538 = vsel %vm1535, %v1537, %v1533
    %v1539 = vmul.f32 1.0, %v1538
    %v1540 = vtanh.pop %v1501
    %v1542 = vrot.slane %v1338, 7
    %v1544 = vmul.f32 %v1524, %v1542
    %1546 = vrot.lane.b32.xlu0 %v1540, 64
    %v1547 = vpop.permute.xlu0 %1546
    %v1549 = vmul.f32 %v1524, %v1547
    %1551 = vrot.lane.b32.xlu0 %v1549, 64
    %v1552 = vpop.permute.xlu0 %1551
    %v1554 = vadd.f32 %v1544, %v1552
    %v1555 = vtanh.pop %v1554
    %1557 = vrot.lane.b32.xlu0 %v1555, 64
    %v1558 = vpop.permute.xlu0 %1557
    %v1560 = vmul.f32 %v1539, %v1558
    %v1562 = vrot.slane %v1449, 2
    %1563 = vrot.lane.b32.xlu0 %v1562, 64
    %v1564 = vpop.permute.xlu0 %1563
    %v1566 = vsel %vm167, %v1560, %v1564
    %v1568 = vrot.slane %v1566, 6
    %1570 = vmatpush.msra.mxu0 %v109
    %1571 = vmatpush.msra.mxu0 %v107
    %1572 = vmatpush.msra.mxu0 %v105
    %1573 = vmatpush.msra.mxu0 %v103
    %1574 = vmatpush.msra.mxu0 %v101
    %1575 = vmatpush.msra.mxu0 %v99
    %1576 = vmatpush.msra.mxu0 %v97
    %1577 = vmatpush.msra.mxu0 %v95
    %1578 = vmatpush.msra.mxu0 %v93
    %1579 = vmatpush.msra.mxu0 %v91
    %1580 = vmatpush.msra.mxu0 %v89
    %1581 = vmatpush.msra.mxu0 %v87
    %1582 = vmatpush.msra.mxu0 %v85
    %1583 = vmatpush.msra.mxu0 %v83
    %1584 = vmatpush.msra.mxu0 %v81
    %1585 = vmatpush.msra.mxu0 %v79
    %1586 = vmatmul.f32.gmra.mxu0 %v1568
    %v1587 = vpop.f32.mrf.mxu0
    %v1588 = vadd.f32 %v271, %v1587
    %1589 = vdwg.mxu0
    %1590 = vmatpush.msra.mxu0 %v110
    %1591 = vmatpush.msra.mxu0 %v108
    %1592 = vmatpush.msra.mxu0 %v106
    %1593 = vmatpush.msra.mxu0 %v104
    %1594 = vmatpush.msra.mxu0 %v102
    %1595 = vmatpush.msra.mxu0 %v100
    %1596 = vmatpush.msra.mxu0 %v98
    %1597 = vmatpush.msra.mxu0 %v96
    %1598 = vmatpush.msra.mxu0 %v94
    %1599 = vmatpush.msra.mxu0 %v92
    %1600 = vmatpush.msra.mxu0 %v90
    %1601 = vmatpush.msra.mxu0 %v88
    %1602 = vmatpush.msra.mxu0 %v86
    %1603 = vmatpush.msra.mxu0 %v84
    %1604 = vmatpush.msra.mxu0 %v82
    %1605 = vmatpush.msra.mxu0 %v80
    %1606 = vmatmul.f32.gmra.mxu0 %v1568
    %v1607 = vpop.f32.mrf.mxu0
    %v1608 = vadd.f32 %v272, %v1607
    %1609 = vdwg.mxu0
    %v1610 = vxor.u32 %v1588, 2147483648
    %v1611 = vxor.u32 %v1608, 2147483648
    %v1612 = vmul.f32 %v1610, 1.442695
    %v1613 = vpow.pop %v1612
    %v1614 = vmul.f32 %v1611, 1.442695
    %v1615 = vpow.pop %v1614
    %v1616 = vadd.f32 %v1613, 1.0
    %v1617 = vadd.f32 %v1615, 1.0
    %v1618 = vrcp.pop %v1616
    %v1619 = vmul.f32 %v1616, %v1618
    %v1620 = vsub.f32 1.0, %v1619
    %v1621 = vmul.f32 %v1618, %v1620
    %v1622 = vadd.f32 %v1618, %v1621
    %vm1623 = vweird.f32 %v1616
    %vm1624 = vweird.f32 %v1618
    %vm1625 = vmor %vm1623, %vm1624
    %v1626 = vsel %vm1625, %v1618, %v1622
    %v1627 = vand.u32 2147483647, %v1616
    %vm1628 = vcmp.eq.f32.partialorder %v1627, 8.507059e+37
    %v1629 = vand.u32 %v1616, 2147483648
    %v1630 = vor.u32 1.1754944e-38, %v1629
    %v1631 = vsel %vm1628, %v1630, %v1626
    %v1632 = vmul.f32 1.0, %v1631
    %v1633 = vrcp.pop %v1617
    %v1634 = vmul.f32 %v1617, %v1633
    %v1635 = vsub.f32 1.0, %v1634
    %v1636 = vmul.f32 %v1633, %v1635
    %v1637 = vadd.f32 %v1633, %v1636
    %vm1638 = vweird.f32 %v1617
    %vm1639 = vweird.f32 %v1633
    %vm1640 = vmor %vm1638, %vm1639
    %v1641 = vsel %vm1640, %v1633, %v1637
    %v1642 = vand.u32 2147483647, %v1617
    %vm1643 = vcmp.eq.f32.partialorder %v1642, 8.507059e+37
    %v1644 = vand.u32 %v1617, 2147483648
    %v1645 = vor.u32 1.1754944e-38, %v1644
    %v1646 = vsel %vm1643, %v1645, %v1641
    %v1647 = vmul.f32 1.0, %v1646
    %v1648 = vtanh.pop %v1608
    %v1649 = vmul.f32 %v1632, %v1443
    %1651 = vrot.lane.b32.xlu0 %v1648, 64
    %v1652 = vpop.permute.xlu0 %1651
    %v1654 = vmul.f32 %v1632, %v1652
    %1656 = vrot.lane.b32.xlu0 %v1654, 64
    %v1657 = vpop.permute.xlu0 %1656
    %v1659 = vadd.f32 %v1649, %v1657
    %v1660 = vtanh.pop %v1659
    %1662 = vrot.lane.b32.xlu0 %v1660, 64
    %v1663 = vpop.permute.xlu0 %1662
    %v1665 = vmul.f32 %v1647, %v1663
    %v1667 = vrot.slane %v1560, 6
    %v1668 = vsel %vm167, %v1667, 0
    %1670 = vmatpush.msra.mxu0 0.0
    %1671 = vmatpush.msra.mxu0 0.0
    %1672 = vmatpush.msra.mxu0 0.0
    %1673 = vmatpush.msra.mxu0 0.0
    %1674 = vmatpush.msra.mxu0 0.0
    %1675 = vmatpush.msra.mxu0 0.0
    %1676 = vmatpush.msra.mxu0 0.0
    %1677 = vmatpush.msra.mxu0 0.0
    %1678 = vmatpush.msra.mxu0 %v77
    %1679 = vmatpush.msra.mxu0 %v75
    %1680 = vmatpush.msra.mxu0 %v73
    %1681 = vmatpush.msra.mxu0 %v71
    %1682 = vmatpush.msra.mxu0 %v69
    %1683 = vmatpush.msra.mxu0 %v67
    %1684 = vmatpush.msra.mxu0 %v65
    %1685 = vmatpush.msra.mxu0 %v63
    %1686 = vmatmul.f32.gmra.mxu0 %v1668
    %v1687 = vpop.f32.mrf.mxu0
    %v1688 = vadd.f32 0.0, %v1687
    %1689 = vdwg.mxu0
    %1690 = vmatpush.msra.mxu0 0.0
    %1691 = vmatpush.msra.mxu0 0.0
    %1692 = vmatpush.msra.mxu0 0.0
    %1693 = vmatpush.msra.mxu0 0.0
    %1694 = vmatpush.msra.mxu0 0.0
    %1695 = vmatpush.msra.mxu0 0.0
    %1696 = vmatpush.msra.mxu0 0.0
    %1697 = vmatpush.msra.mxu0 0.0
    %1698 = vmatpush.msra.mxu0 %v78
    %1699 = vmatpush.msra.mxu0 %v76
    %1700 = vmatpush.msra.mxu0 %v74
    %1701 = vmatpush.msra.mxu0 %v72
    %1702 = vmatpush.msra.mxu0 %v70
    %1703 = vmatpush.msra.mxu0 %v68
    %1704 = vmatpush.msra.mxu0 %v66
    %1705 = vmatpush.msra.mxu0 %v64
    %1706 = vmatmul.f32.gmra.mxu0 %v1668
    %v1707 = vpop.f32.mrf.mxu0
    %v1708 = vadd.f32 0.0, %v1707
    %1709 = vdwg.mxu0
    %v1712 = vrot.slane %v1688, 1
    %v1713 = vrot.slane %v1708, 1
    %v1716 = vadd.f32 %v145, %v1712
    %v1717 = vadd.f32 %v165, %v1713
    %v1718 = vxor.u32 %v1716, 2147483648
    %v1719 = vxor.u32 %v1717, 2147483648
    %v1720 = vmul.f32 %v1718, 1.442695
    %v1721 = vpow.pop %v1720
    %v1722 = vmul.f32 %v1719, 1.442695
    %v1723 = vpow.pop %v1722
    %v1724 = vadd.f32 %v1721, 1.0
    %v1725 = vadd.f32 %v1723, 1.0
    %v1726 = vrcp.pop %v1724
    %v1727 = vmul.f32 %v1724, %v1726
    %v1728 = vsub.f32 1.0, %v1727
    %v1729 = vmul.f32 %v1726, %v1728
    %v1730 = vadd.f32 %v1726, %v1729
    %vm1731 = vweird.f32 %v1724
    %vm1732 = vweird.f32 %v1726
    %vm1733 = vmor %vm1731, %vm1732
    %v1734 = vsel %vm1733, %v1726, %v1730
    %v1735 = vand.u32 2147483647, %v1724
    %vm1736 = vcmp.eq.f32.partialorder %v1735, 8.507059e+37
    %v1737 = vand.u32 %v1724, 2147483648
    %v1738 = vor.u32 1.1754944e-38, %v1737
    %v1739 = vsel %vm1736, %v1738, %v1734
    %v1740 = vmul.f32 1.0, %v1739
    %v1741 = vrcp.pop %v1725
    %v1742 = vmul.f32 %v1725, %v1741
    %v1743 = vsub.f32 1.0, %v1742
    %v1744 = vmul.f32 %v1741, %v1743
    %v1745 = vadd.f32 %v1741, %v1744
    %vm1746 = vweird.f32 %v1725
    %vm1747 = vweird.f32 %v1741
    %vm1748 = vmor %vm1746, %vm1747
    %v1749 = vsel %vm1748, %v1741, %v1745
    %v1750 = vand.u32 2147483647, %v1725
    %vm1751 = vcmp.eq.f32.partialorder %v1750, 8.507059e+37
    %v1752 = vand.u32 %v1725, 2147483648
    %v1753 = vor.u32 1.1754944e-38, %v1752
    %v1754 = vsel %vm1751, %v1753, %v1749
    %v1755 = vmul.f32 1.0, %v1754
    %v1756 = vtanh.pop %v1717
    %v1758 = vrot.slane %v1554, 7
    %v1760 = vmul.f32 %v1740, %v1758
    %1762 = vrot.lane.b32.xlu0 %v1756, 64
    %v1763 = vpop.permute.xlu0 %1762
    %v1765 = vmul.f32 %v1740, %v1763
    %1767 = vrot.lane.b32.xlu0 %v1765, 64
    %v1768 = vpop.permute.xlu0 %1767
    %v1770 = vadd.f32 %v1760, %v1768
    %v1771 = vtanh.pop %v1770
    %1773 = vrot.lane.b32.xlu0 %v1771, 64
    %v1774 = vpop.permute.xlu0 %1773
    %v1776 = vmul.f32 %v1755, %v1774
    %v1778 = vrot.slane %v1665, 1
    %1779 = vrot.lane.b32.xlu0 %v1778, 64
    %v1780 = vpop.permute.xlu0 %1779
    %v1782 = vsel %vm167, %v1776, %v1780
    %v1784 = vrot.slane %v1782, 7
    %1786 = vmatpush.msra.mxu0 %v109
    %1787 = vmatpush.msra.mxu0 %v107
    %1788 = vmatpush.msra.mxu0 %v105
    %1789 = vmatpush.msra.mxu0 %v103
    %1790 = vmatpush.msra.mxu0 %v101
    %1791 = vmatpush.msra.mxu0 %v99
    %1792 = vmatpush.msra.mxu0 %v97
    %1793 = vmatpush.msra.mxu0 %v95
    %1794 = vmatpush.msra.mxu0 %v93
    %1795 = vmatpush.msra.mxu0 %v91
    %1796 = vmatpush.msra.mxu0 %v89
    %1797 = vmatpush.msra.mxu0 %v87
    %1798 = vmatpush.msra.mxu0 %v85
    %1799 = vmatpush.msra.mxu0 %v83
    %1800 = vmatpush.msra.mxu0 %v81
    %1801 = vmatpush.msra.mxu0 %v79
    %1802 = vmatmul.f32.gmra.mxu0 %v1784
    %v1803 = vpop.f32.mrf.mxu0
    %v1804 = vadd.f32 %v271, %v1803
    %1805 = vdwg.mxu0
    %1806 = vmatpush.msra.mxu0 %v110
    %1807 = vmatpush.msra.mxu0 %v108
    %1808 = vmatpush.msra.mxu0 %v106
    %1809 = vmatpush.msra.mxu0 %v104
    %1810 = vmatpush.msra.mxu0 %v102
    %1811 = vmatpush.msra.mxu0 %v100
    %1812 = vmatpush.msra.mxu0 %v98
    %1813 = vmatpush.msra.mxu0 %v96
    %1814 = vmatpush.msra.mxu0 %v94
    %1815 = vmatpush.msra.mxu0 %v92
    %1816 = vmatpush.msra.mxu0 %v90
    %1817 = vmatpush.msra.mxu0 %v88
    %1818 = vmatpush.msra.mxu0 %v86
    %1819 = vmatpush.msra.mxu0 %v84
    %1820 = vmatpush.msra.mxu0 %v82
    %1821 = vmatpush.msra.mxu0 %v80
    %1822 = vmatmul.f32.gmra.mxu0 %v1784
    %v1823 = vpop.f32.mrf.mxu0
    %v1824 = vadd.f32 %v272, %v1823
    %1825 = vdwg.mxu0
    %v1826 = vxor.u32 %v1804, 2147483648
    %v1827 = vxor.u32 %v1824, 2147483648
    %v1828 = vmul.f32 %v1826, 1.442695
    %v1829 = vpow.pop %v1828
    %v1830 = vmul.f32 %v1827, 1.442695
    %v1831 = vpow.pop %v1830
    %v1832 = vadd.f32 %v1829, 1.0
    %v1833 = vadd.f32 %v1831, 1.0
    %v1834 = vrcp.pop %v1832
    %v1835 = vmul.f32 %v1832, %v1834
    %v1836 = vsub.f32 1.0, %v1835
    %v1837 = vmul.f32 %v1834, %v1836
    %v1838 = vadd.f32 %v1834, %v1837
    %vm1839 = vweird.f32 %v1832
    %vm1840 = vweird.f32 %v1834
    %vm1841 = vmor %vm1839, %vm1840
    %v1842 = vsel %vm1841, %v1834, %v1838
    %v1843 = vand.u32 2147483647, %v1832
    %vm1844 = vcmp.eq.f32.partialorder %v1843, 8.507059e+37
    %v1845 = vand.u32 %v1832, 2147483648
    %v1846 = vor.u32 1.1754944e-38, %v1845
    %v1847 = vsel %vm1844, %v1846, %v1842
    %v1848 = vmul.f32 1.0, %v1847
    %v1849 = vrcp.pop %v1833
    %v1850 = vmul.f32 %v1833, %v1849
    %v1851 = vsub.f32 1.0, %v1850
    %v1852 = vmul.f32 %v1849, %v1851
    %v1853 = vadd.f32 %v1849, %v1852
    %vm1854 = vweird.f32 %v1833
    %vm1855 = vweird.f32 %v1849
    %vm1856 = vmor %vm1854, %vm1855
    %v1857 = vsel %vm1856, %v1849, %v1853
    %v1858 = vand.u32 2147483647, %v1833
    %vm1859 = vcmp.eq.f32.partialorder %v1858, 8.507059e+37
    %v1860 = vand.u32 %v1833, 2147483648
    %v1861 = vor.u32 1.1754944e-38, %v1860
    %v1862 = vsel %vm1859, %v1861, %v1857
    %v1863 = vmul.f32 1.0, %v1862
    %v1864 = vtanh.pop %v1824
    %v1865 = vmul.f32 %v1848, %v1659
    %1867 = vrot.lane.b32.xlu0 %v1864, 64
    %v1868 = vpop.permute.xlu0 %1867
    %v1870 = vmul.f32 %v1848, %v1868
    %1872 = vrot.lane.b32.xlu0 %v1870, 64
    %v1873 = vpop.permute.xlu0 %1872
    %v1875 = vadd.f32 %v1865, %v1873
    %v1876 = vtanh.pop %v1875
    %1878 = vrot.lane.b32.xlu0 %v1876, 64
    %v1879 = vpop.permute.xlu0 %1878
    %v1881 = vmul.f32 %v1863, %v1879
    %v1882 = vrot.slane %v585, 7
    %v1884 = vrot.slane %v801, 6
    %v1886 = vrot.slane %v1017, 5
    %v1888 = vrot.slane %v1233, 4
    %v1890 = vrot.slane %v1449, 3
    %v1892 = vrot.slane %v1665, 2
    %v1895 = vrot.slane %v1881, 1
    %vm1897 = vcmask 1040384
    %v1898 = vsel %vm1897, %v370, %v1882
    %vm1899 = vcmask 1041408
    %v1900 = vsel %vm1899, %v1898, %v1884
    %vm1901 = vcmask 1042432
    %v1902 = vsel %vm1901, %v1900, %v1886
    %vm1903 = vcmask 1043456
    %v1904 = vsel %vm1903, %v1902, %v1888
    %vm1905 = vcmask 1044480
    %v1906 = vsel %vm1905, %v1904, %v1890
    %vm1907 = vcmask 1045504
    %v1908 = vsel %vm1907, %v1906, %v1892
    %vm1909 = vcmask 1046528
    %v1910 = vsel %vm1909, %v1908, %v1895
    %v1911 = vld [vmem:[%s6] sm:$0xff]
    %v1912 = vld [vmem:[%s6 + $0x8] sm:$0xff]
    %v1913 = vld [vmem:[%s6 + $0x10] sm:$0xff]
    %v1914 = vld [vmem:[%s6 + $0x18] sm:$0xff]
    %v1915 = vld [vmem:[%s6 + $0x20] sm:$0xff]
    %v1916 = vld [vmem:[%s6 + $0x28] sm:$0xff]
    %v1917 = vld [vmem:[%s6 + $0x30] sm:$0xff]
    %v1918 = vld [vmem:[%s6 + $0x38] sm:$0xff]
    %v1919 = vld [vmem:[%s7] sm:$0x1]
    %v1921 = vperm.slane %v1919, 0
    %v1924 = vsel %vm167, %v1910, 0
    %1926 = vmatpush.msra.mxu0 0.0
    %1927 = vmatpush.msra.mxu0 0.0
    %1928 = vmatpush.msra.mxu0 0.0
    %1929 = vmatpush.msra.mxu0 0.0
    %1930 = vmatpush.msra.mxu0 0.0
    %1931 = vmatpush.msra.mxu0 0.0
    %1932 = vmatpush.msra.mxu0 0.0
    %1933 = vmatpush.msra.mxu0 0.0
    %1934 = vmatpush.msra.mxu0 %v1918
    %1935 = vmatpush.msra.mxu0 %v1917
    %1936 = vmatpush.msra.mxu0 %v1916
    %1937 = vmatpush.msra.mxu0 %v1915
    %1938 = vmatpush.msra.mxu0 %v1914
    %1939 = vmatpush.msra.mxu0 %v1913
    %1940 = vmatpush.msra.mxu0 %v1912
    %1941 = vmatpush.msra.mxu0 %v1911
    %1942 = vmatmul.f32.gmra.mxu0 %v1924
    %v1943 = vpop.f32.mrf.mxu0
    %v1944 = vadd.f32 %v1921, %v1943
    %1945 = vdwg.mxu0
    %vm1946 = vcmask 7168
    %1947 = vst.msk [vmem:[%s8] sm:$0xff] %vm1946, %v1944
    %1949 = vrot.lane.b32.xlu0 %v1944, 127
    %v1950 = vpop.permute.xlu0 %1949
    %1952 = vst.msk [vmem:[%s9] sm:$0xff] %vm1946, %v1950
    // Predicated region
    $region42: #{tpu_custom_call.1} parent=1 // pred_check
      _
    $region43: #{tpu_custom_call.1} parent=1 // pred_check_branch
      %1954 = sbr.rel (0) target = $region45
    $region44: #{tpu_custom_call.1} parent=1 // pred_region
      _
    $region45: #{tpu_custom_call.1} parent=1 // pred_fallthru
      _
    // Predicated region
    $region46: #{tpu_custom_call.1} parent=1 // pred_check
      _
    $region47: #{tpu_custom_call.1} parent=1 // pred_check_branch
      %1956 = sbr.rel (0) target = $region49
    $region48: #{tpu_custom_call.1} parent=1 // pred_region
      _
    $region49: #{tpu_custom_call.1} parent=1 // pred_fallthru
      _
    // Predicated region
    $region50: #{tpu_custom_call.1} parent=1 // pred_check
      _
    $region51: #{tpu_custom_call.1} parent=1 // pred_check_branch
      %1958 = sbr.rel (0) target = $region53
    $region52: #{tpu_custom_call.1} parent=1 // pred_region
      _
    $region53: #{tpu_custom_call.1} parent=1 // pred_fallthru
      _
    // Predicated region
    $region54: #{tpu_custom_call.1} parent=1 // pred_check
      _
    $region55: #{tpu_custom_call.1} parent=1 // pred_check_branch
      %1960 = sbr.rel (0) target = $region57
    $region56: #{tpu_custom_call.1} parent=1 // pred_region
      _
    $region57: #{tpu_custom_call.1} parent=1 // pred_fallthru
      _
    %1961 = vsyncpa [#allocation3], 1
    %1962 = vsyncpa [#allocation5], 1

</llo_original>
